<compile_context>
chip_gen: v7x
topology: tpu7x:2x2x1
jax: 0.10.0
libtpu: 0.0.40
codegen_flags: <defaults>
</compile_context>

<pallas_src>
import functools

import jax
import jax.numpy as jnp
from jax.experimental import pallas as pl
from jax.experimental.pallas import tpu as pltpu


def _elu(a):
    # ELU(alpha=1).  The exponential argument is clamped to <= 0 so the branch
    # jnp.where discards can never overflow to inf.
    return jnp.where(a > 0.0, a, jnp.exp(jnp.minimum(a, 0.0)) - 1.0)


def _cnn_forward_kernel(
    # inputs (per grid step: one squeezed (L, D_in) sequence + resident consts)
    x_ref, scat_ref,
    w_e1, b_e1, w_e2, b_e2, w_e3, b_e3, w_e4, b_e4,
    w_d1, b_d1, w_d2, b_d2, w_d3, b_d3, w_d4, b_d4,
    # output
    o_ref,
    # VMEM scratch (only for the stride-2 encoder conv's padded operand)
    pad_e2,
    *, L, D_in, H1, H2,
):
    dot = functools.partial(jnp.dot, preferred_element_type=jnp.float32)
    f32 = jnp.float32

    L1 = L + 2                      # after Conv1d(K=1, p=1)
    L2 = (L1 + 2 - 3) // 2 + 1      # after Conv1d(K=3, s=2, p=1)
    L3 = L2 - 13                    # after Conv1d(K=14)
    L5 = L3 + 13                    # after ConvT(K=14)
    Ld = 2 * L5 + 2                 # dilated+padded ConvT(K=3, s=2) input
    L6 = Ld - 2                     # after ConvT(K=3, s=2, p=1, op=1)

    x = x_ref[...]                                               # (L, D_in)

    # ------------------------------ encoder --------------------------------
    # E1: Conv1d(D_in -> H1, K=1, stride=1, padding=1), ELU.
    #     Padded operand built as a value (zero rows concatenated), one matmul.
    zrow_in = jnp.zeros((1, D_in), f32)
    xp = jnp.concatenate([zrow_in, x, zrow_in], axis=0)          # (L1, D_in)
    h1 = _elu(dot(xp, w_e1[...]) + b_e1[...])                    # (L1, H1)

    # E2: Conv1d(H1 -> H2, K=3, stride=2, padding=1), ELU.
    #     Stride-2 window gather uses ref-level pl.ds(stride=2) loads; only the
    #     two boundary (pad) rows of the scratch are zeroed.
    zrow_h1 = jnp.zeros((1, H1), f32)
    pad_e2[pl.ds(0, 1), :] = zrow_h1
    pad_e2[pl.ds(1, L1), :] = h1
    pad_e2[pl.ds(L1 + 1, 1), :] = zrow_h1
    col_e2 = jnp.concatenate(
        [pad_e2[pl.ds(k, L2, stride=2), :] for k in range(3)], axis=1)
    h2 = _elu(dot(col_e2, w_e2[...]) + b_e2[...])                # (L2, H2)

    # E3: Conv1d(H2 -> H1, K=14, stride=1), ELU.  im2col stays in registers.
    col_e3 = jnp.concatenate([h2[k:k + L3, :] for k in range(14)], axis=1)
    h3 = _elu(dot(col_e3, w_e3[...]) + b_e3[...])                # (L3, H1)

    # E4: Conv1d(H1 -> D_out, K=1, stride=1), no activation.
    enc = dot(h3, w_e4[...]) + b_e4[...]                         # (L3, D_out)

    # ------------------------------ decoder --------------------------------
    # D1: ConvTranspose1d(D_out -> H1, K=1, stride=1), ELU == pointwise matmul.
    g1 = _elu(dot(enc, w_d1[...]) + b_d1[...])                   # (L3, H1)

    # D2: ConvTranspose1d(H1 -> H2, K=14, stride=1), ELU
    #     == pad 13 zero rows each side + stride-1 K=14 forward conv
    #        (weights already flipped into forward-conv layout on the host).
    zpad13 = jnp.zeros((13, H1), f32)
    g1p = jnp.concatenate([zpad13, g1, zpad13], axis=0)          # (L3+26, H1)
    col_d2 = jnp.concatenate([g1p[k:k + L5, :] for k in range(14)], axis=1)
    g2 = _elu(dot(col_d2, w_d2[...]) + b_d2[...])                # (L5, H2)

    # D3: ConvTranspose1d(H2 -> H1, K=3, stride=2, padding=1, output_padding=1),
    #     ELU.  Zero-dilation + asymmetric pad (1 left / 2 right) is one matmul
    #     against the HOST-precomputed one-hot scatter (row 2*i+1 <- g2[i]),
    #     then a stride-1 K=3 forward conv via register im2col.
    dil = dot(scat_ref[...], g2)                                 # (Ld, H2)
    col_d3 = jnp.concatenate([dil[k:k + L6, :] for k in range(3)], axis=1)
    g3 = _elu(dot(col_d3, w_d3[...]) + b_d3[...])                # (L6, H1)

    # D4: ConvTranspose1d(H1 -> D_out, K=1, stride=1, padding=1), no activation
    #     == crop one row each side + pointwise matmul.
    o_ref[...] = dot(g3[1:L6 - 1, :], w_d4[...]) + b_d4[...]     # (L_out, D_out)


def cnn_forward(xb, params, *, H1, H2, D_out):
    """Fused, batched CNN forward.

    xb: (B, L, D_in) float32; params: 16 arrays in the CNNPallas layouts.
    """
    B, L, D_in = xb.shape
    assert L % 2 == 0, "decoder length round-trips back to L only for even L"
    L1 = L + 2                      # after Conv1d(K=1, p=1)
    L2 = (L1 + 2 - 3) // 2 + 1      # after Conv1d(K=3, s=2, p=1)
    L3 = L2 - 13                    # after Conv1d(K=14)
    assert L3 >= 1, "input too short for the K=14 encoder conv (need L >= 26)"
    L5 = L3 + 13                    # after ConvT(K=14)
    Ld = 2 * L5 + 2                 # dilated+padded ConvT(K=3, s=2) input
    L6 = Ld - 2                     # after ConvT(K=3, s=2, p=1, op=1)
    L_out = L6 - 2                  # after ConvT(K=1, p=1)  (== L for even L)

    f32 = jnp.float32
    # Host-built one-hot dilation/pad scatter for D3 (depends only on L):
    # row 2*i + 1 of the (Ld)-row dilated buffer receives g2[i].
    rows = jnp.arange(Ld, dtype=jnp.int32)[:, None]
    srcs = jnp.arange(L5, dtype=jnp.int32)[None, :]
    scatter = (rows == 2 * srcs + 1).astype(f32)                 # (Ld, L5)

    kernel = functools.partial(_cnn_forward_kernel, L=L, D_in=D_in, H1=H1, H2=H2)

    in_specs = (
        [pl.BlockSpec((None, L, D_in), lambda b: (b, 0, 0)),      # per-step seq
         pl.BlockSpec((Ld, L5), lambda b: (0, 0))]                # resident
        + [pl.BlockSpec(p.shape, lambda b: (0, 0)) for p in params]  # resident
    )
    out_specs = pl.BlockSpec((None, L_out, D_out), lambda b: (b, 0, 0))

    grid_spec = pltpu.PrefetchScalarGridSpec(
        num_scalar_prefetch=0,
        grid=(B,),
        in_specs=in_specs,
        out_specs=out_specs,
        scratch_shapes=[pltpu.VMEM((L1 + 2, H1), f32)],           # pad_e2
    )
    return pl.pallas_call(
        kernel,
        out_shape=jax.ShapeDtypeStruct((B, L_out, D_out), f32),
        grid_spec=grid_spec,
        compiler_params=pltpu.CompilerParams(
            dimension_semantics=("parallel",)),
    )(xb, scatter, *params)


# ----------------------- plain-JAX reference (for checking) -----------------
def _conv1d_ref(x, w, b, K, stride=1, padding=0, elu=False):
    """x: (L, C_in); w: (K*C_in, C_out) in the kernel's layout; b: (1, C_out)."""
    C_in = x.shape[1]
    if padding:
        x = jnp.pad(x, ((padding, padding), (0, 0)))
    L_out = (x.shape[0] - K) // stride + 1
    w3 = w.reshape(K, C_in, -1)
    acc = jnp.zeros((L_out, w.shape[1]), jnp.float32) + b
    for k in range(K):
        win = x[k:k + (L_out - 1) * stride + 1:stride]
        acc = acc + win @ w3[k]
    return _elu(acc) if elu else acc


def _conv_transpose1d_ref(x, w, b, K, stride=1, padding=0, output_padding=0,
                          elu=False):
    """w already stored in equivalent forward-conv layout (K*C_in, C_out)."""
    L_in, C_in = x.shape
    if stride > 1:
        xd = jnp.zeros(((L_in - 1) * stride + 1, C_in), x.dtype)
        xd = xd.at[::stride].set(x)
    else:
        xd = x
    lp = K - 1 - padding
    rp = K - 1 - padding + output_padding
    if lp < 0:
        xd = xd[-lp:]
        lp = 0
    if rp < 0:
        xd = xd[:rp]
        rp = 0
    xd = jnp.pad(xd, ((lp, rp), (0, 0)))
    return _conv1d_ref(xd, w, b, K, stride=1, padding=0, elu=elu)


def _cnn_forward_ref(x, params):
    (w1, b1, w2, b2, w3, b3, w4, b4,
     wd1, bd1, wd2, bd2, wd3, bd3, wd4, bd4) = params
    h = _conv1d_ref(x, w1, b1, 1, stride=1, padding=1, elu=True)
    h = _conv1d_ref(h, w2, b2, 3, stride=2, padding=1, elu=True)
    h = _conv1d_ref(h, w3, b3, 14, stride=1, padding=0, elu=True)
    enc = _conv1d_ref(h, w4, b4, 1, stride=1, padding=0, elu=False)
    h = _conv_transpose1d_ref(enc, wd1, bd1, 1, stride=1, elu=True)
    h = _conv_transpose1d_ref(h, wd2, bd2, 14, stride=1, elu=True)
    h = _conv_transpose1d_ref(h, wd3, bd3, 3, stride=2, padding=1,
                              output_padding=1, elu=True)
    return _conv_transpose1d_ref(h, wd4, bd4, 1, stride=1, padding=1, elu=False)


class CNNPallas:
    """Pallas implementation of CNN(D_in, H1, H2, D_out, xmin, xmax).forward.

    Weights are kept directly in the layouts the fused kernel consumes:
      * Conv1d(C_in -> C_out, K):          W[k*C_in + ci, co] == W_torch[co, ci, k]
      * ConvTranspose1d(C_in -> C_out, K): W[k*C_in + ci, co] == W_torch[ci, co, K-1-k]
        (equivalent forward-conv layout: kernel flipped / channels swapped)
      * biases as (1, C_out).
    """

    def __init__(self, D_in, H1, H2, D_out, xmin, xmax, key):
        self.xmin, self.xmax = xmin, xmax
        self.D_in, self.H1, self.H2, self.D_out = D_in, H1, H2, D_out

        def init(k, K, cin, cout):
            kw, kb = jax.random.split(k)
            bound = 1.0 / float(cin * K) ** 0.5   # PyTorch default U(-b, b)
            w = jax.random.uniform(kw, (K * cin, cout), jnp.float32, -bound, bound)
            b = jax.random.uniform(kb, (1, cout), jnp.float32, -bound, bound)
            return w, b

        ks = jax.random.split(key, 8)
        layers = [
            init(ks[0], 1, D_in, H1),    # encoder Conv1d(K=1, p=1)
            init(ks[1], 3, H1, H2),      # encoder Conv1d(K=3, s=2, p=1)
            init(ks[2], 14, H2, H1),     # encoder Conv1d(K=14)
            init(ks[3], 1, H1, D_out),   # encoder Conv1d(K=1)
            init(ks[4], 1, D_out, H1),   # decoder ConvT(K=1)
            init(ks[5], 14, H1, H2),     # decoder ConvT(K=14)
            init(ks[6], 3, H2, H1),      # decoder ConvT(K=3, s=2, p=1, op=1)
            init(ks[7], 1, H1, D_out),   # decoder ConvT(K=1, p=1)
        ]
        self.params = tuple(a for wb in layers for a in wb)   # 16 arrays

    def __call__(self, x):
        # Mirrors CNN.forward: `x_i = self.normalize(x)` is computed but never
        # used (the reference even refers to an undefined global `dtype`).
        # TODO(synk): x_i is dead code in the reference forward; kept here as
        # an unused computation (DCE'd under jit).
        _ = (x - self.xmin) / (self.xmax - self.xmin) - 0.5

        squeeze = (x.ndim == 2)            # original forward is unbatched
        xb = x[None] if squeeze else x     # (B, L, D_in)
        out = cnn_forward(xb, self.params, H1=self.H1, H2=self.H2,
                          D_out=self.D_out)
        return out[0] if squeeze else out


if __name__ == "__main__":
    D_in, H1, H2, D_out = 4, 8, 16, 4
    B, L = 8, 32  # batch of sequences; each x is (L, D_in), matching encoder(x.T)

    key = jax.random.PRNGKey(0)
    kx, kp = jax.random.split(key)
    xb = jax.random.normal(kx, (B, L, D_in), jnp.float32)

    model = CNNPallas(D_in, H1, H2, D_out, xmin=-3.0, xmax=3.0, key=kp)
    out = jax.jit(model.__call__)(xb)
    out = jax.block_until_ready(out)

    assert out.shape == (B, L, D_out), out.shape
    assert bool(jnp.all(jnp.isfinite(out)))

    # Cross-check the fused kernel against a plain-JAX layer-by-layer reference.
    ref = jnp.stack([_cnn_forward_ref(xb[b], model.params) for b in range(B)])
    max_err = float(jnp.max(jnp.abs(out - ref)))
    assert max_err < 1e-4, f"mismatch vs plain-JAX reference: {max_err}"

    # Also exercise the original unbatched forward path.
    out1 = jax.block_until_ready(jax.jit(model.__call__)(xb[0]))
    assert out1.shape == (L, D_out)
    assert float(jnp.max(jnp.abs(out1 - ref[0]))) < 1e-4

    print("KERNEL_OK")
</pallas_src>

<mosaic_0001>
module attributes {stable_mosaic.version = 11 : i64} {
  func.func @_cnn_forward_kernel(%arg0: i32, %arg1: memref<1x32x4xf32, #tpu.memory_space<vmem>>, %arg2: memref<36x17xf32, #tpu.memory_space<vmem>>, %arg3: memref<4x8xf32, #tpu.memory_space<vmem>>, %arg4: memref<1x8xf32, #tpu.memory_space<vmem>>, %arg5: memref<24x16xf32, #tpu.memory_space<vmem>>, %arg6: memref<1x16xf32, #tpu.memory_space<vmem>>, %arg7: memref<224x8xf32, #tpu.memory_space<vmem>>, %arg8: memref<1x8xf32, #tpu.memory_space<vmem>>, %arg9: memref<8x4xf32, #tpu.memory_space<vmem>>, %arg10: memref<1x4xf32, #tpu.memory_space<vmem>>, %arg11: memref<4x8xf32, #tpu.memory_space<vmem>>, %arg12: memref<1x8xf32, #tpu.memory_space<vmem>>, %arg13: memref<112x16xf32, #tpu.memory_space<vmem>>, %arg14: memref<1x16xf32, #tpu.memory_space<vmem>>, %arg15: memref<48x8xf32, #tpu.memory_space<vmem>>, %arg16: memref<1x8xf32, #tpu.memory_space<vmem>>, %arg17: memref<8x4xf32, #tpu.memory_space<vmem>>, %arg18: memref<1x4xf32, #tpu.memory_space<vmem>>, %arg19: memref<1x32x4xf32, #tpu.memory_space<vmem>>, %arg20: memref<36x8xf32, #tpu.memory_space<vmem>>) attributes {dimension_semantics = [#tpu.dimension_semantics<parallel>], iteration_bounds = array<i64: 8>, scalar_prefetch = 0 : i64, scratch_operands = 1 : i64, tpu.core_type = #tpu.core_type<tc>, window_params = [{transform_indices = @transform_0, window_bounds = array<i64: 1, 32, 4>}, {pipeline_mode = #tpu.pipeline_mode<synchronous>, transform_indices = @transform_1, window_bounds = array<i64: 36, 17>}, {pipeline_mode = #tpu.pipeline_mode<synchronous>, transform_indices = @transform_2, window_bounds = array<i64: 4, 8>}, {pipeline_mode = #tpu.pipeline_mode<synchronous>, transform_indices = @transform_3, window_bounds = array<i64: 1, 8>}, {pipeline_mode = #tpu.pipeline_mode<synchronous>, transform_indices = @transform_4, window_bounds = array<i64: 24, 16>}, {pipeline_mode = #tpu.pipeline_mode<synchronous>, transform_indices = @transform_5, window_bounds = array<i64: 1, 16>}, {pipeline_mode = #tpu.pipeline_mode<synchronous>, transform_indices = @transform_6, window_bounds = array<i64: 224, 8>}, {pipeline_mode = #tpu.pipeline_mode<synchronous>, transform_indices = @transform_7, window_bounds = array<i64: 1, 8>}, {pipeline_mode = #tpu.pipeline_mode<synchronous>, transform_indices = @transform_8, window_bounds = array<i64: 8, 4>}, {pipeline_mode = #tpu.pipeline_mode<synchronous>, transform_indices = @transform_9, window_bounds = array<i64: 1, 4>}, {pipeline_mode = #tpu.pipeline_mode<synchronous>, transform_indices = @transform_10, window_bounds = array<i64: 4, 8>}, {pipeline_mode = #tpu.pipeline_mode<synchronous>, transform_indices = @transform_11, window_bounds = array<i64: 1, 8>}, {pipeline_mode = #tpu.pipeline_mode<synchronous>, transform_indices = @transform_12, window_bounds = array<i64: 112, 16>}, {pipeline_mode = #tpu.pipeline_mode<synchronous>, transform_indices = @transform_13, window_bounds = array<i64: 1, 16>}, {pipeline_mode = #tpu.pipeline_mode<synchronous>, transform_indices = @transform_14, window_bounds = array<i64: 48, 8>}, {pipeline_mode = #tpu.pipeline_mode<synchronous>, transform_indices = @transform_15, window_bounds = array<i64: 1, 8>}, {pipeline_mode = #tpu.pipeline_mode<synchronous>, transform_indices = @transform_16, window_bounds = array<i64: 8, 4>}, {pipeline_mode = #tpu.pipeline_mode<synchronous>, transform_indices = @transform_17, window_bounds = array<i64: 1, 4>}, {transform_indices = @transform_18, window_bounds = array<i64: 1, 32, 4>}]} {
    %c0 = arith.constant 0 : index
    %c0_0 = arith.constant 0 : index
    %c0_1 = arith.constant 0 : index
    %0 = vector.load %arg1[%c0, %c0_0, %c0_1] : memref<1x32x4xf32, #tpu.memory_space<vmem>>, vector<1x32x4xf32>
    %1 = vector.shape_cast %0 : vector<1x32x4xf32> to vector<32x4xf32>
    %cst = arith.constant 0.000000e+00 : f32
    %2 = vector.broadcast %cst : f32 to vector<1x4xf32>
    %3 = tpu.concatenate %2, %1, %2 in 0 : vector<1x4xf32>, vector<32x4xf32>, vector<1x4xf32> -> vector<34x4xf32>
    %c0_2 = arith.constant 0 : index
    %c0_3 = arith.constant 0 : index
    %4 = vector.load %arg3[%c0_2, %c0_3] : memref<4x8xf32, #tpu.memory_space<vmem>>, vector<4x8xf32>
    %cst_4 = arith.constant dense<0.000000e+00> : vector<34x8xf32>
    %5 = tpu.matmul %3, %4, %cst_4 {dimension_numbers = #tpu.dot_dimension_numbers<[1], [0], [0], [1], [0, 0, 1, 1], [], []>} : vector<34x4xf32>, vector<4x8xf32>, vector<34x8xf32> -> vector<34x8xf32>
    %c0_5 = arith.constant 0 : index
    %c0_6 = arith.constant 0 : index
    %6 = vector.load %arg4[%c0_5, %c0_6] : memref<1x8xf32, #tpu.memory_space<vmem>>, vector<1x8xf32>
    %7 = vector.broadcast %6 : vector<1x8xf32> to vector<34x8xf32>
    %8 = arith.addf %5, %7 : vector<34x8xf32>
    %cst_7 = arith.constant 0.000000e+00 : f32
    %9 = vector.broadcast %cst_7 : f32 to vector<34x8xf32>
    %10 = arith.cmpf ogt, %8, %9 : vector<34x8xf32>
    %cst_8 = arith.constant 0.000000e+00 : f32
    %11 = vector.broadcast %cst_8 : f32 to vector<34x8xf32>
    %12 = arith.minimumf %8, %11 : vector<34x8xf32>
    %13 = math.exp %12 : vector<34x8xf32>
    %cst_9 = arith.constant 1.000000e+00 : f32
    %14 = vector.broadcast %cst_9 : f32 to vector<34x8xf32>
    %15 = arith.subf %13, %14 : vector<34x8xf32>
    %16 = arith.select %10, %8, %15 : vector<34x8xi1>, vector<34x8xf32>
    %cst_10 = arith.constant 0.000000e+00 : f32
    %17 = vector.broadcast %cst_10 : f32 to vector<1x8xf32>
    %c0_11 = arith.constant 0 : index
    %c0_12 = arith.constant 0 : index
    %18 = vector.load %arg20[%c0_11, %c0_12] : memref<36x8xf32, #tpu.memory_space<vmem>>, vector<1x8xf32>
    tpu.vector_store %arg20[%c0_11, %c0_12], %17 {strides = array<i32>} : memref<36x8xf32, #tpu.memory_space<vmem>>, vector<1x8xf32>,
    %c1 = arith.constant 1 : index
    %c0_13 = arith.constant 0 : index
    %19 = vector.load %arg20[%c1, %c0_13] : memref<36x8xf32, #tpu.memory_space<vmem>>, vector<34x8xf32>
    tpu.vector_store %arg20[%c1, %c0_13], %16 {strides = array<i32>} : memref<36x8xf32, #tpu.memory_space<vmem>>, vector<34x8xf32>,
    %c35 = arith.constant 35 : index
    %c0_14 = arith.constant 0 : index
    %20 = vector.load %arg20[%c35, %c0_14] : memref<36x8xf32, #tpu.memory_space<vmem>>, vector<1x8xf32>
    tpu.vector_store %arg20[%c35, %c0_14], %17 {strides = array<i32>} : memref<36x8xf32, #tpu.memory_space<vmem>>, vector<1x8xf32>,
    %c0_15 = arith.constant 0 : index
    %c0_16 = arith.constant 0 : index
    %21 = tpu.strided_load %arg20[%c0_15, %c0_16] {strides = array<i32: 2, 1>} : memref<36x8xf32, #tpu.memory_space<vmem>>, vector<17x8xf32>
    %c1_17 = arith.constant 1 : index
    %c0_18 = arith.constant 0 : index
    %22 = tpu.strided_load %arg20[%c1_17, %c0_18] {strides = array<i32: 2, 1>} : memref<36x8xf32, #tpu.memory_space<vmem>>, vector<17x8xf32>
    %c2 = arith.constant 2 : index
    %c0_19 = arith.constant 0 : index
    %23 = tpu.strided_load %arg20[%c2, %c0_19] {strides = array<i32: 2, 1>} : memref<36x8xf32, #tpu.memory_space<vmem>>, vector<17x8xf32>
    %24 = tpu.concatenate %21, %22, %23 in 1 : vector<17x8xf32>, vector<17x8xf32>, vector<17x8xf32> -> vector<17x24xf32>
    %c0_20 = arith.constant 0 : index
    %c0_21 = arith.constant 0 : index
    %25 = vector.load %arg5[%c0_20, %c0_21] : memref<24x16xf32, #tpu.memory_space<vmem>>, vector<24x16xf32>
    %cst_22 = arith.constant dense<0.000000e+00> : vector<17x16xf32>
    %26 = tpu.matmul %24, %25, %cst_22 {dimension_numbers = #tpu.dot_dimension_numbers<[1], [0], [0], [1], [0, 0, 1, 1], [], []>} : vector<17x24xf32>, vector<24x16xf32>, vector<17x16xf32> -> vector<17x16xf32>
    %c0_23 = arith.constant 0 : index
    %c0_24 = arith.constant 0 : index
    %27 = vector.load %arg6[%c0_23, %c0_24] : memref<1x16xf32, #tpu.memory_space<vmem>>, vector<1x16xf32>
    %28 = vector.broadcast %27 : vector<1x16xf32> to vector<17x16xf32>
    %29 = arith.addf %26, %28 : vector<17x16xf32>
    %cst_25 = arith.constant 0.000000e+00 : f32
    %30 = vector.broadcast %cst_25 : f32 to vector<17x16xf32>
    %31 = arith.cmpf ogt, %29, %30 : vector<17x16xf32>
    %cst_26 = arith.constant 0.000000e+00 : f32
    %32 = vector.broadcast %cst_26 : f32 to vector<17x16xf32>
    %33 = arith.minimumf %29, %32 : vector<17x16xf32>
    %34 = math.exp %33 : vector<17x16xf32>
    %cst_27 = arith.constant 1.000000e+00 : f32
    %35 = vector.broadcast %cst_27 : f32 to vector<17x16xf32>
    %36 = arith.subf %34, %35 : vector<17x16xf32>
    %37 = arith.select %31, %29, %36 : vector<17x16xi1>, vector<17x16xf32>
    %38 = vector.extract_strided_slice %37 {offsets = [0, 0], sizes = [4, 16], strides = [1, 1]} : vector<17x16xf32> to vector<4x16xf32>
    %39 = vector.extract_strided_slice %37 {offsets = [1, 0], sizes = [4, 16], strides = [1, 1]} : vector<17x16xf32> to vector<4x16xf32>
    %40 = vector.extract_strided_slice %37 {offsets = [2, 0], sizes = [4, 16], strides = [1, 1]} : vector<17x16xf32> to vector<4x16xf32>
    %41 = vector.extract_strided_slice %37 {offsets = [3, 0], sizes = [4, 16], strides = [1, 1]} : vector<17x16xf32> to vector<4x16xf32>
    %42 = vector.extract_strided_slice %37 {offsets = [4, 0], sizes = [4, 16], strides = [1, 1]} : vector<17x16xf32> to vector<4x16xf32>
    %43 = vector.extract_strided_slice %37 {offsets = [5, 0], sizes = [4, 16], strides = [1, 1]} : vector<17x16xf32> to vector<4x16xf32>
    %44 = vector.extract_strided_slice %37 {offsets = [6, 0], sizes = [4, 16], strides = [1, 1]} : vector<17x16xf32> to vector<4x16xf32>
    %45 = vector.extract_strided_slice %37 {offsets = [7, 0], sizes = [4, 16], strides = [1, 1]} : vector<17x16xf32> to vector<4x16xf32>
    %46 = vector.extract_strided_slice %37 {offsets = [8, 0], sizes = [4, 16], strides = [1, 1]} : vector<17x16xf32> to vector<4x16xf32>
    %47 = vector.extract_strided_slice %37 {offsets = [9, 0], sizes = [4, 16], strides = [1, 1]} : vector<17x16xf32> to vector<4x16xf32>
    %48 = vector.extract_strided_slice %37 {offsets = [10, 0], sizes = [4, 16], strides = [1, 1]} : vector<17x16xf32> to vector<4x16xf32>
    %49 = vector.extract_strided_slice %37 {offsets = [11, 0], sizes = [4, 16], strides = [1, 1]} : vector<17x16xf32> to vector<4x16xf32>
    %50 = vector.extract_strided_slice %37 {offsets = [12, 0], sizes = [4, 16], strides = [1, 1]} : vector<17x16xf32> to vector<4x16xf32>
    %51 = vector.extract_strided_slice %37 {offsets = [13, 0], sizes = [4, 16], strides = [1, 1]} : vector<17x16xf32> to vector<4x16xf32>
    %52 = tpu.concatenate %38, %39, %40, %41, %42, %43, %44, %45, %46, %47, %48, %49, %50, %51 in 1 : vector<4x16xf32>, vector<4x16xf32>, vector<4x16xf32>, vector<4x16xf32>, vector<4x16xf32>, vector<4x16xf32>, vector<4x16xf32>, vector<4x16xf32>, vector<4x16xf32>, vector<4x16xf32>, vector<4x16xf32>, vector<4x16xf32>, vector<4x16xf32>, vector<4x16xf32> -> vector<4x224xf32>
    %c0_28 = arith.constant 0 : index
    %c0_29 = arith.constant 0 : index
    %53 = vector.load %arg7[%c0_28, %c0_29] : memref<224x8xf32, #tpu.memory_space<vmem>>, vector<224x8xf32>
    %cst_30 = arith.constant dense<0.000000e+00> : vector<4x8xf32>
    %54 = tpu.matmul %52, %53, %cst_30 {dimension_numbers = #tpu.dot_dimension_numbers<[1], [0], [0], [1], [0, 0, 1, 1], [], []>} : vector<4x224xf32>, vector<224x8xf32>, vector<4x8xf32> -> vector<4x8xf32>
    %c0_31 = arith.constant 0 : index
    %c0_32 = arith.constant 0 : index
    %55 = vector.load %arg8[%c0_31, %c0_32] : memref<1x8xf32, #tpu.memory_space<vmem>>, vector<1x8xf32>
    %56 = vector.broadcast %55 : vector<1x8xf32> to vector<4x8xf32>
    %57 = arith.addf %54, %56 : vector<4x8xf32>
    %cst_33 = arith.constant 0.000000e+00 : f32
    %58 = vector.broadcast %cst_33 : f32 to vector<4x8xf32>
    %59 = arith.cmpf ogt, %57, %58 : vector<4x8xf32>
    %cst_34 = arith.constant 0.000000e+00 : f32
    %60 = vector.broadcast %cst_34 : f32 to vector<4x8xf32>
    %61 = arith.minimumf %57, %60 : vector<4x8xf32>
    %62 = math.exp %61 : vector<4x8xf32>
    %cst_35 = arith.constant 1.000000e+00 : f32
    %63 = vector.broadcast %cst_35 : f32 to vector<4x8xf32>
    %64 = arith.subf %62, %63 : vector<4x8xf32>
    %65 = arith.select %59, %57, %64 : vector<4x8xi1>, vector<4x8xf32>
    %c0_36 = arith.constant 0 : index
    %c0_37 = arith.constant 0 : index
    %66 = vector.load %arg9[%c0_36, %c0_37] : memref<8x4xf32, #tpu.memory_space<vmem>>, vector<8x4xf32>
    %cst_38 = arith.constant dense<0.000000e+00> : vector<4x4xf32>
    %67 = tpu.matmul %65, %66, %cst_38 {dimension_numbers = #tpu.dot_dimension_numbers<[1], [0], [0], [1], [0, 0, 1, 1], [], []>} : vector<4x8xf32>, vector<8x4xf32>, vector<4x4xf32> -> vector<4x4xf32>
    %c0_39 = arith.constant 0 : index
    %c0_40 = arith.constant 0 : index
    %68 = vector.load %arg10[%c0_39, %c0_40] : memref<1x4xf32, #tpu.memory_space<vmem>>, vector<1x4xf32>
    %69 = vector.broadcast %68 : vector<1x4xf32> to vector<4x4xf32>
    %70 = arith.addf %67, %69 : vector<4x4xf32>
    %c0_41 = arith.constant 0 : index
    %c0_42 = arith.constant 0 : index
    %71 = vector.load %arg11[%c0_41, %c0_42] : memref<4x8xf32, #tpu.memory_space<vmem>>, vector<4x8xf32>
    %cst_43 = arith.constant dense<0.000000e+00> : vector<4x8xf32>
    %72 = tpu.matmul %70, %71, %cst_43 {dimension_numbers = #tpu.dot_dimension_numbers<[1], [0], [0], [1], [0, 0, 1, 1], [], []>} : vector<4x4xf32>, vector<4x8xf32>, vector<4x8xf32> -> vector<4x8xf32>
    %c0_44 = arith.constant 0 : index
    %c0_45 = arith.constant 0 : index
    %73 = vector.load %arg12[%c0_44, %c0_45] : memref<1x8xf32, #tpu.memory_space<vmem>>, vector<1x8xf32>
    %74 = vector.broadcast %73 : vector<1x8xf32> to vector<4x8xf32>
    %75 = arith.addf %72, %74 : vector<4x8xf32>
    %cst_46 = arith.constant 0.000000e+00 : f32
    %76 = vector.broadcast %cst_46 : f32 to vector<4x8xf32>
    %77 = arith.cmpf ogt, %75, %76 : vector<4x8xf32>
    %cst_47 = arith.constant 0.000000e+00 : f32
    %78 = vector.broadcast %cst_47 : f32 to vector<4x8xf32>
    %79 = arith.minimumf %75, %78 : vector<4x8xf32>
    %80 = math.exp %79 : vector<4x8xf32>
    %cst_48 = arith.constant 1.000000e+00 : f32
    %81 = vector.broadcast %cst_48 : f32 to vector<4x8xf32>
    %82 = arith.subf %80, %81 : vector<4x8xf32>
    %83 = arith.select %77, %75, %82 : vector<4x8xi1>, vector<4x8xf32>
    %cst_49 = arith.constant 0.000000e+00 : f32
    %84 = vector.broadcast %cst_49 : f32 to vector<13x8xf32>
    %85 = tpu.concatenate %84, %83, %84 in 0 : vector<13x8xf32>, vector<4x8xf32>, vector<13x8xf32> -> vector<30x8xf32>
    %86 = vector.extract_strided_slice %85 {offsets = [0, 0], sizes = [17, 8], strides = [1, 1]} : vector<30x8xf32> to vector<17x8xf32>
    %87 = vector.extract_strided_slice %85 {offsets = [1, 0], sizes = [17, 8], strides = [1, 1]} : vector<30x8xf32> to vector<17x8xf32>
    %88 = vector.extract_strided_slice %85 {offsets = [2, 0], sizes = [17, 8], strides = [1, 1]} : vector<30x8xf32> to vector<17x8xf32>
    %89 = vector.extract_strided_slice %85 {offsets = [3, 0], sizes = [17, 8], strides = [1, 1]} : vector<30x8xf32> to vector<17x8xf32>
    %90 = vector.extract_strided_slice %85 {offsets = [4, 0], sizes = [17, 8], strides = [1, 1]} : vector<30x8xf32> to vector<17x8xf32>
    %91 = vector.extract_strided_slice %85 {offsets = [5, 0], sizes = [17, 8], strides = [1, 1]} : vector<30x8xf32> to vector<17x8xf32>
    %92 = vector.extract_strided_slice %85 {offsets = [6, 0], sizes = [17, 8], strides = [1, 1]} : vector<30x8xf32> to vector<17x8xf32>
    %93 = vector.extract_strided_slice %85 {offsets = [7, 0], sizes = [17, 8], strides = [1, 1]} : vector<30x8xf32> to vector<17x8xf32>
    %94 = vector.extract_strided_slice %85 {offsets = [8, 0], sizes = [17, 8], strides = [1, 1]} : vector<30x8xf32> to vector<17x8xf32>
    %95 = vector.extract_strided_slice %85 {offsets = [9, 0], sizes = [17, 8], strides = [1, 1]} : vector<30x8xf32> to vector<17x8xf32>
    %96 = vector.extract_strided_slice %85 {offsets = [10, 0], sizes = [17, 8], strides = [1, 1]} : vector<30x8xf32> to vector<17x8xf32>
    %97 = vector.extract_strided_slice %85 {offsets = [11, 0], sizes = [17, 8], strides = [1, 1]} : vector<30x8xf32> to vector<17x8xf32>
    %98 = vector.extract_strided_slice %85 {offsets = [12, 0], sizes = [17, 8], strides = [1, 1]} : vector<30x8xf32> to vector<17x8xf32>
    %99 = vector.extract_strided_slice %85 {offsets = [13, 0], sizes = [17, 8], strides = [1, 1]} : vector<30x8xf32> to vector<17x8xf32>
    %100 = tpu.concatenate %86, %87, %88, %89, %90, %91, %92, %93, %94, %95, %96, %97, %98, %99 in 1 : vector<17x8xf32>, vector<17x8xf32>, vector<17x8xf32>, vector<17x8xf32>, vector<17x8xf32>, vector<17x8xf32>, vector<17x8xf32>, vector<17x8xf32>, vector<17x8xf32>, vector<17x8xf32>, vector<17x8xf32>, vector<17x8xf32>, vector<17x8xf32>, vector<17x8xf32> -> vector<17x112xf32>
    %c0_50 = arith.constant 0 : index
    %c0_51 = arith.constant 0 : index
    %101 = vector.load %arg13[%c0_50, %c0_51] : memref<112x16xf32, #tpu.memory_space<vmem>>, vector<112x16xf32>
    %cst_52 = arith.constant dense<0.000000e+00> : vector<17x16xf32>
    %102 = tpu.matmul %100, %101, %cst_52 {dimension_numbers = #tpu.dot_dimension_numbers<[1], [0], [0], [1], [0, 0, 1, 1], [], []>} : vector<17x112xf32>, vector<112x16xf32>, vector<17x16xf32> -> vector<17x16xf32>
    %c0_53 = arith.constant 0 : index
    %c0_54 = arith.constant 0 : index
    %103 = vector.load %arg14[%c0_53, %c0_54] : memref<1x16xf32, #tpu.memory_space<vmem>>, vector<1x16xf32>
    %104 = vector.broadcast %103 : vector<1x16xf32> to vector<17x16xf32>
    %105 = arith.addf %102, %104 : vector<17x16xf32>
    %cst_55 = arith.constant 0.000000e+00 : f32
    %106 = vector.broadcast %cst_55 : f32 to vector<17x16xf32>
    %107 = arith.cmpf ogt, %105, %106 : vector<17x16xf32>
    %cst_56 = arith.constant 0.000000e+00 : f32
    %108 = vector.broadcast %cst_56 : f32 to vector<17x16xf32>
    %109 = arith.minimumf %105, %108 : vector<17x16xf32>
    %110 = math.exp %109 : vector<17x16xf32>
    %cst_57 = arith.constant 1.000000e+00 : f32
    %111 = vector.broadcast %cst_57 : f32 to vector<17x16xf32>
    %112 = arith.subf %110, %111 : vector<17x16xf32>
    %113 = arith.select %107, %105, %112 : vector<17x16xi1>, vector<17x16xf32>
    %c0_58 = arith.constant 0 : index
    %c0_59 = arith.constant 0 : index
    %114 = vector.load %arg2[%c0_58, %c0_59] : memref<36x17xf32, #tpu.memory_space<vmem>>, vector<36x17xf32>
    %cst_60 = arith.constant dense<0.000000e+00> : vector<36x16xf32>
    %115 = tpu.matmul %114, %113, %cst_60 {dimension_numbers = #tpu.dot_dimension_numbers<[1], [0], [0], [1], [0, 0, 1, 1], [], []>} : vector<36x17xf32>, vector<17x16xf32>, vector<36x16xf32> -> vector<36x16xf32>
    %116 = vector.extract_strided_slice %115 {offsets = [0, 0], sizes = [34, 16], strides = [1, 1]} : vector<36x16xf32> to vector<34x16xf32>
    %117 = vector.extract_strided_slice %115 {offsets = [1, 0], sizes = [34, 16], strides = [1, 1]} : vector<36x16xf32> to vector<34x16xf32>
    %118 = vector.extract_strided_slice %115 {offsets = [2, 0], sizes = [34, 16], strides = [1, 1]} : vector<36x16xf32> to vector<34x16xf32>
    %119 = tpu.concatenate %116, %117, %118 in 1 : vector<34x16xf32>, vector<34x16xf32>, vector<34x16xf32> -> vector<34x48xf32>
    %c0_61 = arith.constant 0 : index
    %c0_62 = arith.constant 0 : index
    %120 = vector.load %arg15[%c0_61, %c0_62] : memref<48x8xf32, #tpu.memory_space<vmem>>, vector<48x8xf32>
    %cst_63 = arith.constant dense<0.000000e+00> : vector<34x8xf32>
    %121 = tpu.matmul %119, %120, %cst_63 {dimension_numbers = #tpu.dot_dimension_numbers<[1], [0], [0], [1], [0, 0, 1, 1], [], []>} : vector<34x48xf32>, vector<48x8xf32>, vector<34x8xf32> -> vector<34x8xf32>
    %c0_64 = arith.constant 0 : index
    %c0_65 = arith.constant 0 : index
    %122 = vector.load %arg16[%c0_64, %c0_65] : memref<1x8xf32, #tpu.memory_space<vmem>>, vector<1x8xf32>
    %123 = vector.broadcast %122 : vector<1x8xf32> to vector<34x8xf32>
    %124 = arith.addf %121, %123 : vector<34x8xf32>
    %cst_66 = arith.constant 0.000000e+00 : f32
    %125 = vector.broadcast %cst_66 : f32 to vector<34x8xf32>
    %126 = arith.cmpf ogt, %124, %125 : vector<34x8xf32>
    %cst_67 = arith.constant 0.000000e+00 : f32
    %127 = vector.broadcast %cst_67 : f32 to vector<34x8xf32>
    %128 = arith.minimumf %124, %127 : vector<34x8xf32>
    %129 = math.exp %128 : vector<34x8xf32>
    %cst_68 = arith.constant 1.000000e+00 : f32
    %130 = vector.broadcast %cst_68 : f32 to vector<34x8xf32>
    %131 = arith.subf %129, %130 : vector<34x8xf32>
    %132 = arith.select %126, %124, %131 : vector<34x8xi1>, vector<34x8xf32>
    %133 = vector.extract_strided_slice %132 {offsets = [1, 0], sizes = [32, 8], strides = [1, 1]} : vector<34x8xf32> to vector<32x8xf32>
    %c0_69 = arith.constant 0 : index
    %c0_70 = arith.constant 0 : index
    %134 = vector.load %arg17[%c0_69, %c0_70] : memref<8x4xf32, #tpu.memory_space<vmem>>, vector<8x4xf32>
    %cst_71 = arith.constant dense<0.000000e+00> : vector<32x4xf32>
    %135 = tpu.matmul %133, %134, %cst_71 {dimension_numbers = #tpu.dot_dimension_numbers<[1], [0], [0], [1], [0, 0, 1, 1], [], []>} : vector<32x8xf32>, vector<8x4xf32>, vector<32x4xf32> -> vector<32x4xf32>
    %c0_72 = arith.constant 0 : index
    %c0_73 = arith.constant 0 : index
    %136 = vector.load %arg18[%c0_72, %c0_73] : memref<1x4xf32, #tpu.memory_space<vmem>>, vector<1x4xf32>
    %137 = vector.broadcast %136 : vector<1x4xf32> to vector<32x4xf32>
    %138 = arith.addf %135, %137 : vector<32x4xf32>
    %c0_74 = arith.constant 0 : index
    %c0_75 = arith.constant 0 : index
    %c0_76 = arith.constant 0 : index
    %139 = vector.load %arg19[%c0_74, %c0_75, %c0_76] : memref<1x32x4xf32, #tpu.memory_space<vmem>>, vector<1x32x4xf32>
    %140 = vector.shape_cast %139 : vector<1x32x4xf32> to vector<32x4xf32>
    %141 = vector.shape_cast %138 : vector<32x4xf32> to vector<1x32x4xf32>
    tpu.vector_store %arg19[%c0_74, %c0_75, %c0_76], %141 {strides = array<i32>} : memref<1x32x4xf32, #tpu.memory_space<vmem>>, vector<1x32x4xf32>,
    return
  }
  func.func @transform_0(%arg0: i32) -> (i32, i32, i32) {
    %c0_i32 = arith.constant 0 : i32
    %c0_i32_0 = arith.constant 0 : i32
    %c0_i32_1 = arith.constant 0 : i32
    return %arg0, %c0_i32, %c0_i32_0 : i32, i32, i32
  }
  func.func @transform_1(%arg0: i32) -> (i32, i32) {
    %c0_i32 = arith.constant 0 : i32
    %c0_i32_0 = arith.constant 0 : i32
    %c0_i32_1 = arith.constant 0 : i32
    return %c0_i32, %c0_i32_0 : i32, i32
  }
  func.func @transform_2(%arg0: i32) -> (i32, i32) {
    %c0_i32 = arith.constant 0 : i32
    %c0_i32_0 = arith.constant 0 : i32
    %c0_i32_1 = arith.constant 0 : i32
    return %c0_i32, %c0_i32_0 : i32, i32
  }
  func.func @transform_3(%arg0: i32) -> (i32, i32) {
    %c0_i32 = arith.constant 0 : i32
    %c0_i32_0 = arith.constant 0 : i32
    %c0_i32_1 = arith.constant 0 : i32
    return %c0_i32, %c0_i32_0 : i32, i32
  }
  func.func @transform_4(%arg0: i32) -> (i32, i32) {
    %c0_i32 = arith.constant 0 : i32
    %c0_i32_0 = arith.constant 0 : i32
    %c0_i32_1 = arith.constant 0 : i32
    return %c0_i32, %c0_i32_0 : i32, i32
  }
  func.func @transform_5(%arg0: i32) -> (i32, i32) {
    %c0_i32 = arith.constant 0 : i32
    %c0_i32_0 = arith.constant 0 : i32
    %c0_i32_1 = arith.constant 0 : i32
    return %c0_i32, %c0_i32_0 : i32, i32
  }
  func.func @transform_6(%arg0: i32) -> (i32, i32) {
    %c0_i32 = arith.constant 0 : i32
    %c0_i32_0 = arith.constant 0 : i32
    %c0_i32_1 = arith.constant 0 : i32
    return %c0_i32, %c0_i32_0 : i32, i32
  }
  func.func @transform_7(%arg0: i32) -> (i32, i32) {
    %c0_i32 = arith.constant 0 : i32
    %c0_i32_0 = arith.constant 0 : i32
    %c0_i32_1 = arith.constant 0 : i32
    return %c0_i32, %c0_i32_0 : i32, i32
  }
  func.func @transform_8(%arg0: i32) -> (i32, i32) {
    %c0_i32 = arith.constant 0 : i32
    %c0_i32_0 = arith.constant 0 : i32
    %c0_i32_1 = arith.constant 0 : i32
    return %c0_i32, %c0_i32_0 : i32, i32
  }
  func.func @transform_9(%arg0: i32) -> (i32, i32) {
    %c0_i32 = arith.constant 0 : i32
    %c0_i32_0 = arith.constant 0 : i32
    %c0_i32_1 = arith.constant 0 : i32
    return %c0_i32, %c0_i32_0 : i32, i32
  }
  func.func @transform_10(%arg0: i32) -> (i32, i32) {
    %c0_i32 = arith.constant 0 : i32
    %c0_i32_0 = arith.constant 0 : i32
    %c0_i32_1 = arith.constant 0 : i32
    return %c0_i32, %c0_i32_0 : i32, i32
  }
  func.func @transform_11(%arg0: i32) -> (i32, i32) {
    %c0_i32 = arith.constant 0 : i32
    %c0_i32_0 = arith.constant 0 : i32
    %c0_i32_1 = arith.constant 0 : i32
    return %c0_i32, %c0_i32_0 : i32, i32
  }
  func.func @transform_12(%arg0: i32) -> (i32, i32) {
    %c0_i32 = arith.constant 0 : i32
    %c0_i32_0 = arith.constant 0 : i32
    %c0_i32_1 = arith.constant 0 : i32
    return %c0_i32, %c0_i32_0 : i32, i32
  }
  func.func @transform_13(%arg0: i32) -> (i32, i32) {
    %c0_i32 = arith.constant 0 : i32
    %c0_i32_0 = arith.constant 0 : i32
    %c0_i32_1 = arith.constant 0 : i32
    return %c0_i32, %c0_i32_0 : i32, i32
  }
  func.func @transform_14(%arg0: i32) -> (i32, i32) {
    %c0_i32 = arith.constant 0 : i32
    %c0_i32_0 = arith.constant 0 : i32
    %c0_i32_1 = arith.constant 0 : i32
    return %c0_i32, %c0_i32_0 : i32, i32
  }
  func.func @transform_15(%arg0: i32) -> (i32, i32) {
    %c0_i32 = arith.constant 0 : i32
    %c0_i32_0 = arith.constant 0 : i32
    %c0_i32_1 = arith.constant 0 : i32
    return %c0_i32, %c0_i32_0 : i32, i32
  }
  func.func @transform_16(%arg0: i32) -> (i32, i32) {
    %c0_i32 = arith.constant 0 : i32
    %c0_i32_0 = arith.constant 0 : i32
    %c0_i32_1 = arith.constant 0 : i32
    return %c0_i32, %c0_i32_0 : i32, i32
  }
  func.func @transform_17(%arg0: i32) -> (i32, i32) {
    %c0_i32 = arith.constant 0 : i32
    %c0_i32_0 = arith.constant 0 : i32
    %c0_i32_1 = arith.constant 0 : i32
    return %c0_i32, %c0_i32_0 : i32, i32
  }
  func.func @transform_18(%arg0: i32) -> (i32, i32, i32) {
    %c0_i32 = arith.constant 0 : i32
    %c0_i32_0 = arith.constant 0 : i32
    %c0_i32_1 = arith.constant 0 : i32
    return %arg0, %c0_i32, %c0_i32_0 : i32, i32, i32
  }
}

</mosaic_0001>

<llo_original>
// kernel: a_call__.1
$region0: #{a_call__.1}
  #allocation0 [shape = 'u32[]', space=smem, size = 0x4, offset = 0x4, fixed_abs, tag = 'smem constant byte address 0x4 - core index']
  #allocation1 [shape = 'u32[144,128]{1,0:T(1,128)}', space=vmem, size = 0x12000, scoped, tag = 'internal scratch']
  #allocation2 [shape = 'f32[36,8]{1,0:T(8,128)}', space=vmem, size = 0x5000, scoped, tag = 'scratch operand']
  %s0 = inlined_call_operand.vmem [shape: f32[8,32,4], index: 0, kind: input, shape index: {}]
  %s1 = inlined_call_operand.vmem [shape: f32[36,17], index: 1, kind: input, shape index: {}]
  %s2 = inlined_call_operand.hbm [shape: f32[4,8], index: 2, kind: input, shape index: {}]
  %s3 = inlined_call_operand.hbm [shape: f32[1,8], index: 3, kind: input, shape index: {}]
  %s4 = inlined_call_operand.hbm [shape: f32[24,16], index: 4, kind: input, shape index: {}]
  %s5 = inlined_call_operand.hbm [shape: f32[1,16], index: 5, kind: input, shape index: {}]
  %s6 = inlined_call_operand.vmem [shape: f32[224,8], index: 6, kind: input, shape index: {}]
  %s7 = inlined_call_operand.hbm [shape: f32[1,8], index: 7, kind: input, shape index: {}]
  %s8 = inlined_call_operand.vmem [shape: f32[8,4], index: 8, kind: input, shape index: {}]
  %s9 = inlined_call_operand.vmem [shape: f32[1,4], index: 9, kind: input, shape index: {}]
  %s10 = inlined_call_operand.vmem [shape: f32[4,8], index: 10, kind: input, shape index: {}]
  %s11 = inlined_call_operand.vmem [shape: f32[1,8], index: 11, kind: input, shape index: {}]
  %s12 = inlined_call_operand.vmem [shape: f32[112,16], index: 12, kind: input, shape index: {}]
  %s13 = inlined_call_operand.vmem [shape: f32[1,16], index: 13, kind: input, shape index: {}]
  %s14 = inlined_call_operand.hbm [shape: f32[48,8], index: 14, kind: input, shape index: {}]
  %s15 = inlined_call_operand.vmem [shape: f32[1,8], index: 15, kind: input, shape index: {}]
  %s16 = inlined_call_operand.vmem [shape: f32[8,4], index: 16, kind: input, shape index: {}]
  %s17 = inlined_call_operand.vmem [shape: f32[1,4], index: 17, kind: input, shape index: {}]
  %s18 = inlined_call_operand.vmem [shape: f32[8,32,4], index: 18, kind: output, shape index: {}]
  %s19 = sld [smem:[#allocation0]]
  $region129: #{a_call__.1} parent=0
    _
  %s21 = ssub.s32 1, %s19
  %s22 = scalar_select 0, %s21, %s19
  $region1: #{a_call__.1} parent=0
    #allocation3 [shape = 'u8[2048]{0}', space=vmem, size = 0x800, scoped, tag = 'input window, operand 2, single buffered']
    #allocation4 [shape = 's32[2]{0}', space=sflag, size = 0x8, scoped, tag = 'scoped memory for a_call__.1']
    #allocation5 [shape = 'u8[512]{0}', space=vmem, size = 0x400, scoped, tag = 'input window, operand 3, single buffered']
    #allocation6 [shape = 's32[1]{0}', space=sflag, size = 0x4, scoped, tag = 'scoped memory for a_call__.1']
    #allocation7 [shape = 'u8[12288]{0}', space=vmem, size = 0x3000, scoped, tag = 'input window, operand 4, single buffered']
    #allocation8 [shape = 'u8[512]{0}', space=vmem, size = 0x400, scoped, tag = 'input window, operand 5, single buffered']
    #allocation9 [shape = 's32[1]{0}', space=sflag, size = 0x4, scoped, tag = 'scoped memory for a_call__.1']
    #allocation10 [shape = 'u8[512]{0}', space=vmem, size = 0x400, scoped, tag = 'input window, operand 7, single buffered']
    #allocation11 [shape = 'u8[24576]{0}', space=vmem, size = 0x6000, scoped, tag = 'input window, operand 14, single buffered']
    #allocation12 [shape = 's32[1]{0}', space=sflag, size = 0x4, scoped, tag = 'scoped memory for a_call__.1']
    %23 = vsyncpa [#allocation4], 0
    %24 = vsyncpa [#allocation6], 0
    %25 = vsyncpa [#allocation9], 0
    %26 = vsyncpa [#allocation12], 0
    loop: start=0, step=1, limit=10
    $region2: #{a_call__.1} parent=1 // loop_pre_header
      _
    $region3: #{a_call__.1} parent=1 // loop_header
      %s28 = sphi 0, %s32
      %p29 = scmp.ge.s32.totalorder %s28, 10
      %s38 = sphi 0, %s40
      %s41 = sphi 0, %s38
      %s42 = sphi 0, %s41
      %s58 = sphi 0, %s42
      %s62 = sphi 0, %s62
      %s64 = sphi 0, %s62
      %s65 = sphi 0, %s64
      %s79 = sphi 0, %s65
      %s83 = sphi 0, %s83
      %s85 = sphi 0, %s83
      %s86 = sphi 0, %s85
      %s100 = sphi 0, %s86
      %s104 = sphi 0, %s104
      %s106 = sphi 0, %s104
      %s107 = sphi 0, %s106
      %s121 = sphi 0, %s107
      %s125 = sphi 0, %s125
      %s127 = sphi 0, %s125
      %s128 = sphi 0, %s127
      %s142 = sphi 0, %s128
      %s146 = sphi 0, %s146
      %s148 = sphi 0, %s146
      %s149 = sphi 0, %s148
      %s163 = sphi 0, %s149
      %s167 = sphi 0, %s167
      %s169 = sphi 0, %s167
      %s170 = sphi 0, %s169
      %s184 = sphi 0, %s170
      %s188 = sphi 0, %s188
      %s190 = sphi 0, %s188
      %s191 = sphi 0, %s190
      %s205 = sphi 0, %s191
      %s209 = sphi 0, %s209
      %s211 = sphi 0, %s209
      %s212 = sphi 0, %s211
      %s226 = sphi 0, %s212
      %s230 = sphi 0, %s230
      %s232 = sphi 0, %s230
      %s233 = sphi 0, %s232
      %s247 = sphi 0, %s233
      %s251 = sphi 0, %s251
      %s253 = sphi 0, %s251
      %s254 = sphi 0, %s253
      %s268 = sphi 0, %s254
      %s272 = sphi 0, %s272
      %s274 = sphi 0, %s272
      %s275 = sphi 0, %s274
      %s289 = sphi 0, %s275
      %s293 = sphi 0, %s293
      %s295 = sphi 0, %s293
      %s296 = sphi 0, %s295
      %s310 = sphi 0, %s296
      %s314 = sphi 0, %s314
      %s316 = sphi 0, %s314
      %s317 = sphi 0, %s316
      %s331 = sphi 0, %s317
      %s335 = sphi 0, %s335
      %s337 = sphi 0, %s335
      %s338 = sphi 0, %s337
      %s352 = sphi 0, %s338
      %s356 = sphi 0, %s356
      %s358 = sphi 0, %s356
      %s359 = sphi 0, %s358
      %s373 = sphi 0, %s359
      %s377 = sphi 0, %s377
      %s379 = sphi 0, %s377
      %s380 = sphi 0, %s379
      %s394 = sphi 0, %s380
      %s398 = sphi 0, %s398
      %s400 = sphi 0, %s398
      %s401 = sphi 0, %s400
      %s415 = sphi 0, %s401
      %s421 = sphi 0, %s423
      %s424 = sphi 0, %s421
      %s425 = sphi 0, %s424
      %s441 = sphi 0, %s425
    $region4: #{a_call__.1} parent=1 // loop_header_branch
      %31 = sbr.rel (%p29) target = $region8
    $region5: #{a_call__.1} parent=1 // loop_body
      %s33 = ssub.s32 %s28, 1
      %s34 = ssub.s32 %s28, 2
      %s35 = sadd.s32 %s28, 1
      %s36 = ssub.s32 %s28, %s35
      %p37 = scmp.eq.s32.totalorder %s36, 0
      %s39 = sadd.s32 %s38, 1
      %s40 = scalar_select %p37, %s38, %s39
      %p43 = pneg %p37
      %p44 = scmp.eq.s32.totalorder %s28, 7
      %p45 = por %p43, %p44
      %p46 = scmp.ne.s32.totalorder %s38, %s41
      %p47 = scmp.eq.s32.totalorder %s28, 0
      %p48 = por %p46, %p47
      %p49 = scmp.ne.s32.totalorder %s38, %s41
      %p50 = scmp.eq.s32.totalorder %s33, 7
      %p51 = por %p49, %p50
      %p52 = scmp.ne.s32.totalorder %s41, %s42
      %p53 = scmp.eq.s32.totalorder %s33, 0
      %p54 = por %p52, %p53
      %p55 = scmp.ne.s32.totalorder %s41, %s42
      %p56 = scmp.eq.s32.totalorder %s34, 7
      %p57 = por %p55, %p56
      %p59 = scmp.ne.s32.totalorder %s42, %s58
      %p60 = scmp.eq.s32.totalorder %s34, 0
      %p61 = por %p59, %p60
      %s63 = sadd.s32 %s62, 1
      %p66 = scmp.eq.s32.totalorder %s28, 7
      %p67 = scmp.ne.s32.totalorder %s62, %s64
      %p68 = scmp.eq.s32.totalorder %s28, 0
      %p69 = por %p67, %p68
      %p70 = scmp.ne.s32.totalorder %s62, %s64
      %p71 = scmp.eq.s32.totalorder %s33, 7
      %p72 = por %p70, %p71
      %p73 = scmp.ne.s32.totalorder %s64, %s65
      %p74 = scmp.eq.s32.totalorder %s33, 0
      %p75 = por %p73, %p74
      %p76 = scmp.ne.s32.totalorder %s64, %s65
      %p77 = scmp.eq.s32.totalorder %s34, 7
      %p78 = por %p76, %p77
      %p80 = scmp.ne.s32.totalorder %s65, %s79
      %p81 = scmp.eq.s32.totalorder %s34, 0
      %p82 = por %p80, %p81
      %s84 = sadd.s32 %s83, 1
      %p87 = scmp.eq.s32.totalorder %s28, 7
      %p88 = scmp.ne.s32.totalorder %s83, %s85
      %p89 = scmp.eq.s32.totalorder %s28, 0
      %p90 = por %p88, %p89
      %p91 = scmp.ne.s32.totalorder %s83, %s85
      %p92 = scmp.eq.s32.totalorder %s33, 7
      %p93 = por %p91, %p92
      %p94 = scmp.ne.s32.totalorder %s85, %s86
      %p95 = scmp.eq.s32.totalorder %s33, 0
      %p96 = por %p94, %p95
      %p97 = scmp.ne.s32.totalorder %s85, %s86
      %p98 = scmp.eq.s32.totalorder %s34, 7
      %p99 = por %p97, %p98
      %p101 = scmp.ne.s32.totalorder %s86, %s100
      %p102 = scmp.eq.s32.totalorder %s34, 0
      %p103 = por %p101, %p102
      %s105 = sadd.s32 %s104, 1
      %p108 = scmp.eq.s32.totalorder %s28, 7
      %p109 = scmp.ne.s32.totalorder %s104, %s106
      %p110 = scmp.eq.s32.totalorder %s28, 0
      %p111 = por %p109, %p110
      %p112 = scmp.ne.s32.totalorder %s104, %s106
      %p113 = scmp.eq.s32.totalorder %s33, 7
      %p114 = por %p112, %p113
      %p115 = scmp.ne.s32.totalorder %s106, %s107
      %p116 = scmp.eq.s32.totalorder %s33, 0
      %p117 = por %p115, %p116
      %p118 = scmp.ne.s32.totalorder %s106, %s107
      %p119 = scmp.eq.s32.totalorder %s34, 7
      %p120 = por %p118, %p119
      %p122 = scmp.ne.s32.totalorder %s107, %s121
      %p123 = scmp.eq.s32.totalorder %s34, 0
      %p124 = por %p122, %p123
      %s126 = sadd.s32 %s125, 1
      %p129 = scmp.eq.s32.totalorder %s28, 7
      %p130 = scmp.ne.s32.totalorder %s125, %s127
      %p131 = scmp.eq.s32.totalorder %s28, 0
      %p132 = por %p130, %p131
      %p133 = scmp.ne.s32.totalorder %s125, %s127
      %p134 = scmp.eq.s32.totalorder %s33, 7
      %p135 = por %p133, %p134
      %p136 = scmp.ne.s32.totalorder %s127, %s128
      %p137 = scmp.eq.s32.totalorder %s33, 0
      %p138 = por %p136, %p137
      %p139 = scmp.ne.s32.totalorder %s127, %s128
      %p140 = scmp.eq.s32.totalorder %s34, 7
      %p141 = por %p139, %p140
      %p143 = scmp.ne.s32.totalorder %s128, %s142
      %p144 = scmp.eq.s32.totalorder %s34, 0
      %p145 = por %p143, %p144
      %s147 = sadd.s32 %s146, 1
      %p150 = scmp.eq.s32.totalorder %s28, 7
      %p151 = scmp.ne.s32.totalorder %s146, %s148
      %p152 = scmp.eq.s32.totalorder %s28, 0
      %p153 = por %p151, %p152
      %p154 = scmp.ne.s32.totalorder %s146, %s148
      %p155 = scmp.eq.s32.totalorder %s33, 7
      %p156 = por %p154, %p155
      %p157 = scmp.ne.s32.totalorder %s148, %s149
      %p158 = scmp.eq.s32.totalorder %s33, 0
      %p159 = por %p157, %p158
      %p160 = scmp.ne.s32.totalorder %s148, %s149
      %p161 = scmp.eq.s32.totalorder %s34, 7
      %p162 = por %p160, %p161
      %p164 = scmp.ne.s32.totalorder %s149, %s163
      %p165 = scmp.eq.s32.totalorder %s34, 0
      %p166 = por %p164, %p165
      %s168 = sadd.s32 %s167, 1
      %p171 = scmp.eq.s32.totalorder %s28, 7
      %p172 = scmp.ne.s32.totalorder %s167, %s169
      %p173 = scmp.eq.s32.totalorder %s28, 0
      %p174 = por %p172, %p173
      %p175 = scmp.ne.s32.totalorder %s167, %s169
      %p176 = scmp.eq.s32.totalorder %s33, 7
      %p177 = por %p175, %p176
      %p178 = scmp.ne.s32.totalorder %s169, %s170
      %p179 = scmp.eq.s32.totalorder %s33, 0
      %p180 = por %p178, %p179
      %p181 = scmp.ne.s32.totalorder %s169, %s170
      %p182 = scmp.eq.s32.totalorder %s34, 7
      %p183 = por %p181, %p182
      %p185 = scmp.ne.s32.totalorder %s170, %s184
      %p186 = scmp.eq.s32.totalorder %s34, 0
      %p187 = por %p185, %p186
      %s189 = sadd.s32 %s188, 1
      %p192 = scmp.eq.s32.totalorder %s28, 7
      %p193 = scmp.ne.s32.totalorder %s188, %s190
      %p194 = scmp.eq.s32.totalorder %s28, 0
      %p195 = por %p193, %p194
      %p196 = scmp.ne.s32.totalorder %s188, %s190
      %p197 = scmp.eq.s32.totalorder %s33, 7
      %p198 = por %p196, %p197
      %p199 = scmp.ne.s32.totalorder %s190, %s191
      %p200 = scmp.eq.s32.totalorder %s33, 0
      %p201 = por %p199, %p200
      %p202 = scmp.ne.s32.totalorder %s190, %s191
      %p203 = scmp.eq.s32.totalorder %s34, 7
      %p204 = por %p202, %p203
      %p206 = scmp.ne.s32.totalorder %s191, %s205
      %p207 = scmp.eq.s32.totalorder %s34, 0
      %p208 = por %p206, %p207
      %s210 = sadd.s32 %s209, 1
      %p213 = scmp.eq.s32.totalorder %s28, 7
      %p214 = scmp.ne.s32.totalorder %s209, %s211
      %p215 = scmp.eq.s32.totalorder %s28, 0
      %p216 = por %p214, %p215
      %p217 = scmp.ne.s32.totalorder %s209, %s211
      %p218 = scmp.eq.s32.totalorder %s33, 7
      %p219 = por %p217, %p218
      %p220 = scmp.ne.s32.totalorder %s211, %s212
      %p221 = scmp.eq.s32.totalorder %s33, 0
      %p222 = por %p220, %p221
      %p223 = scmp.ne.s32.totalorder %s211, %s212
      %p224 = scmp.eq.s32.totalorder %s34, 7
      %p225 = por %p223, %p224
      %p227 = scmp.ne.s32.totalorder %s212, %s226
      %p228 = scmp.eq.s32.totalorder %s34, 0
      %p229 = por %p227, %p228
      %s231 = sadd.s32 %s230, 1
      %p234 = scmp.eq.s32.totalorder %s28, 7
      %p235 = scmp.ne.s32.totalorder %s230, %s232
      %p236 = scmp.eq.s32.totalorder %s28, 0
      %p237 = por %p235, %p236
      %p238 = scmp.ne.s32.totalorder %s230, %s232
      %p239 = scmp.eq.s32.totalorder %s33, 7
      %p240 = por %p238, %p239
      %p241 = scmp.ne.s32.totalorder %s232, %s233
      %p242 = scmp.eq.s32.totalorder %s33, 0
      %p243 = por %p241, %p242
      %p244 = scmp.ne.s32.totalorder %s232, %s233
      %p245 = scmp.eq.s32.totalorder %s34, 7
      %p246 = por %p244, %p245
      %p248 = scmp.ne.s32.totalorder %s233, %s247
      %p249 = scmp.eq.s32.totalorder %s34, 0
      %p250 = por %p248, %p249
      %s252 = sadd.s32 %s251, 1
      %p255 = scmp.eq.s32.totalorder %s28, 7
      %p256 = scmp.ne.s32.totalorder %s251, %s253
      %p257 = scmp.eq.s32.totalorder %s28, 0
      %p258 = por %p256, %p257
      %p259 = scmp.ne.s32.totalorder %s251, %s253
      %p260 = scmp.eq.s32.totalorder %s33, 7
      %p261 = por %p259, %p260
      %p262 = scmp.ne.s32.totalorder %s253, %s254
      %p263 = scmp.eq.s32.totalorder %s33, 0
      %p264 = por %p262, %p263
      %p265 = scmp.ne.s32.totalorder %s253, %s254
      %p266 = scmp.eq.s32.totalorder %s34, 7
      %p267 = por %p265, %p266
      %p269 = scmp.ne.s32.totalorder %s254, %s268
      %p270 = scmp.eq.s32.totalorder %s34, 0
      %p271 = por %p269, %p270
      %s273 = sadd.s32 %s272, 1
      %p276 = scmp.eq.s32.totalorder %s28, 7
      %p277 = scmp.ne.s32.totalorder %s272, %s274
      %p278 = scmp.eq.s32.totalorder %s28, 0
      %p279 = por %p277, %p278
      %p280 = scmp.ne.s32.totalorder %s272, %s274
      %p281 = scmp.eq.s32.totalorder %s33, 7
      %p282 = por %p280, %p281
      %p283 = scmp.ne.s32.totalorder %s274, %s275
      %p284 = scmp.eq.s32.totalorder %s33, 0
      %p285 = por %p283, %p284
      %p286 = scmp.ne.s32.totalorder %s274, %s275
      %p287 = scmp.eq.s32.totalorder %s34, 7
      %p288 = por %p286, %p287
      %p290 = scmp.ne.s32.totalorder %s275, %s289
      %p291 = scmp.eq.s32.totalorder %s34, 0
      %p292 = por %p290, %p291
      %s294 = sadd.s32 %s293, 1
      %p297 = scmp.eq.s32.totalorder %s28, 7
      %p298 = scmp.ne.s32.totalorder %s293, %s295
      %p299 = scmp.eq.s32.totalorder %s28, 0
      %p300 = por %p298, %p299
      %p301 = scmp.ne.s32.totalorder %s293, %s295
      %p302 = scmp.eq.s32.totalorder %s33, 7
      %p303 = por %p301, %p302
      %p304 = scmp.ne.s32.totalorder %s295, %s296
      %p305 = scmp.eq.s32.totalorder %s33, 0
      %p306 = por %p304, %p305
      %p307 = scmp.ne.s32.totalorder %s295, %s296
      %p308 = scmp.eq.s32.totalorder %s34, 7
      %p309 = por %p307, %p308
      %p311 = scmp.ne.s32.totalorder %s296, %s310
      %p312 = scmp.eq.s32.totalorder %s34, 0
      %p313 = por %p311, %p312
      %s315 = sadd.s32 %s314, 1
      %p318 = scmp.eq.s32.totalorder %s28, 7
      %p319 = scmp.ne.s32.totalorder %s314, %s316
      %p320 = scmp.eq.s32.totalorder %s28, 0
      %p321 = por %p319, %p320
      %p322 = scmp.ne.s32.totalorder %s314, %s316
      %p323 = scmp.eq.s32.totalorder %s33, 7
      %p324 = por %p322, %p323
      %p325 = scmp.ne.s32.totalorder %s316, %s317
      %p326 = scmp.eq.s32.totalorder %s33, 0
      %p327 = por %p325, %p326
      %p328 = scmp.ne.s32.totalorder %s316, %s317
      %p329 = scmp.eq.s32.totalorder %s34, 7
      %p330 = por %p328, %p329
      %p332 = scmp.ne.s32.totalorder %s317, %s331
      %p333 = scmp.eq.s32.totalorder %s34, 0
      %p334 = por %p332, %p333
      %s336 = sadd.s32 %s335, 1
      %p339 = scmp.eq.s32.totalorder %s28, 7
      %p340 = scmp.ne.s32.totalorder %s335, %s337
      %p341 = scmp.eq.s32.totalorder %s28, 0
      %p342 = por %p340, %p341
      %p343 = scmp.ne.s32.totalorder %s335, %s337
      %p344 = scmp.eq.s32.totalorder %s33, 7
      %p345 = por %p343, %p344
      %p346 = scmp.ne.s32.totalorder %s337, %s338
      %p347 = scmp.eq.s32.totalorder %s33, 0
      %p348 = por %p346, %p347
      %p349 = scmp.ne.s32.totalorder %s337, %s338
      %p350 = scmp.eq.s32.totalorder %s34, 7
      %p351 = por %p349, %p350
      %p353 = scmp.ne.s32.totalorder %s338, %s352
      %p354 = scmp.eq.s32.totalorder %s34, 0
      %p355 = por %p353, %p354
      %s357 = sadd.s32 %s356, 1
      %p360 = scmp.eq.s32.totalorder %s28, 7
      %p361 = scmp.ne.s32.totalorder %s356, %s358
      %p362 = scmp.eq.s32.totalorder %s28, 0
      %p363 = por %p361, %p362
      %p364 = scmp.ne.s32.totalorder %s356, %s358
      %p365 = scmp.eq.s32.totalorder %s33, 7
      %p366 = por %p364, %p365
      %p367 = scmp.ne.s32.totalorder %s358, %s359
      %p368 = scmp.eq.s32.totalorder %s33, 0
      %p369 = por %p367, %p368
      %p370 = scmp.ne.s32.totalorder %s358, %s359
      %p371 = scmp.eq.s32.totalorder %s34, 7
      %p372 = por %p370, %p371
      %p374 = scmp.ne.s32.totalorder %s359, %s373
      %p375 = scmp.eq.s32.totalorder %s34, 0
      %p376 = por %p374, %p375
      %s378 = sadd.s32 %s377, 1
      %p381 = scmp.eq.s32.totalorder %s28, 7
      %p382 = scmp.ne.s32.totalorder %s377, %s379
      %p383 = scmp.eq.s32.totalorder %s28, 0
      %p384 = por %p382, %p383
      %p385 = scmp.ne.s32.totalorder %s377, %s379
      %p386 = scmp.eq.s32.totalorder %s33, 7
      %p387 = por %p385, %p386
      %p388 = scmp.ne.s32.totalorder %s379, %s380
      %p389 = scmp.eq.s32.totalorder %s33, 0
      %p390 = por %p388, %p389
      %p391 = scmp.ne.s32.totalorder %s379, %s380
      %p392 = scmp.eq.s32.totalorder %s34, 7
      %p393 = por %p391, %p392
      %p395 = scmp.ne.s32.totalorder %s380, %s394
      %p396 = scmp.eq.s32.totalorder %s34, 0
      %p397 = por %p395, %p396
      %s399 = sadd.s32 %s398, 1
      %p402 = scmp.eq.s32.totalorder %s28, 7
      %p403 = scmp.ne.s32.totalorder %s398, %s400
      %p404 = scmp.eq.s32.totalorder %s28, 0
      %p405 = por %p403, %p404
      %p406 = scmp.ne.s32.totalorder %s398, %s400
      %p407 = scmp.eq.s32.totalorder %s33, 7
      %p408 = por %p406, %p407
      %p409 = scmp.ne.s32.totalorder %s400, %s401
      %p410 = scmp.eq.s32.totalorder %s33, 0
      %p411 = por %p409, %p410
      %p412 = scmp.ne.s32.totalorder %s400, %s401
      %p413 = scmp.eq.s32.totalorder %s34, 7
      %p414 = por %p412, %p413
      %p416 = scmp.ne.s32.totalorder %s401, %s415
      %p417 = scmp.eq.s32.totalorder %s34, 0
      %p418 = por %p416, %p417
      %s419 = ssub.s32 %s28, %s35
      %p420 = scmp.eq.s32.totalorder %s419, 0
      %s422 = sadd.s32 %s421, 1
      %s423 = scalar_select %p420, %s421, %s422
      %p426 = pneg %p420
      %p427 = scmp.eq.s32.totalorder %s28, 7
      %p428 = por %p426, %p427
      %p429 = scmp.ne.s32.totalorder %s421, %s424
      %p430 = scmp.eq.s32.totalorder %s28, 0
      %p431 = por %p429, %p430
      %p432 = scmp.ne.s32.totalorder %s421, %s424
      %p433 = scmp.eq.s32.totalorder %s33, 7
      %p434 = por %p432, %p433
      %p435 = scmp.ne.s32.totalorder %s424, %s425
      %p436 = scmp.eq.s32.totalorder %s33, 0
      %p437 = por %p435, %p436
      %p438 = scmp.ne.s32.totalorder %s424, %s425
      %p439 = scmp.eq.s32.totalorder %s34, 7
      %p440 = por %p438, %p439
      %p442 = scmp.ne.s32.totalorder %s425, %s441
      %p443 = scmp.eq.s32.totalorder %s34, 0
      %p444 = por %p442, %p443
      %p445 = scmp.le.s32.totalorder 1, %s28
      %p446 = scmp.lt.s32.totalorder %s28, 9
      %p447 = pnand %p445, %p446
      %p448 = pneg %p447
      // Predicated region
      $region9: #{a_call__.1} parent=5 // pred_check
        _
      $region10: #{a_call__.1} parent=5 // pred_check_branch
        %450 = sbr.rel (%p447) target = $region12
      $region11: #{a_call__.1} parent=5 // pred_region
        %s451 = ssub.s32 %s28, 1
        // Predicated region
        $region13: #{a_call__.1} parent=11 // pred_check
          %p452 = pneg %p75
        $region14: #{a_call__.1} parent=11 // pred_check_branch
          %454 = sbr.rel (%p452) target = $region16
        $region15: #{a_call__.1} parent=11 // pred_region
          _
        $region16: #{a_call__.1} parent=11 // pred_fallthru
          _
        // Predicated region
        $region17: #{a_call__.1} parent=11 // pred_check
          %p455 = pneg %p96
        $region18: #{a_call__.1} parent=11 // pred_check_branch
          %457 = sbr.rel (%p455) target = $region20
        $region19: #{a_call__.1} parent=11 // pred_region
          %s459 = ssub.s32 64, 64
          %460 = vsyncadd [#allocation4], %s459
          %s462 = sshll.u32 [#allocation3], 4
          %s463 = int_to_ptr.vmem [resolvable:$true] %s462
          %465 = dma.hbm_to_vmem [thread:$0]  %s2, 64, %s463, [#allocation4]
        $region20: #{a_call__.1} parent=11 // pred_fallthru
          _
        // Predicated region
        $region21: #{a_call__.1} parent=11 // pred_check
          %p466 = pneg %p117
        $region22: #{a_call__.1} parent=11 // pred_check_branch
          %468 = sbr.rel (%p466) target = $region24
        $region23: #{a_call__.1} parent=11 // pred_region
          %s470 = ssub.s32 16, 16
          %471 = vsyncadd [#allocation6], %s470
          %s473 = sshll.u32 [#allocation5], 4
          %s474 = int_to_ptr.vmem [resolvable:$true] %s473
          %476 = dma.hbm_to_vmem [thread:$0]  %s3, 16, %s474, [#allocation6]
        $region24: #{a_call__.1} parent=11 // pred_fallthru
          _
        // Predicated region
        $region25: #{a_call__.1} parent=11 // pred_check
          %p477 = pneg %p138
        $region26: #{a_call__.1} parent=11 // pred_check_branch
          %479 = sbr.rel (%p477) target = $region28
        $region27: #{a_call__.1} parent=11 // pred_region
          %s481 = ssub.s32 384, 384
          %482 = vsyncadd [#allocation6], %s481
          %s483 = sshll.u32 [#allocation7], 4
          %s484 = int_to_ptr.vmem [resolvable:$true] %s483
          %489 = dma.hbm_to_vmem [thread:$0]  %s4, 384, %s484, [#allocation6], 128, 128, 8
        $region28: #{a_call__.1} parent=11 // pred_fallthru
          _
        // Predicated region
        $region29: #{a_call__.1} parent=11 // pred_check
          %p490 = pneg %p159
        $region30: #{a_call__.1} parent=11 // pred_check_branch
          %492 = sbr.rel (%p490) target = $region32
        $region31: #{a_call__.1} parent=11 // pred_region
          %s494 = ssub.s32 16, 16
          %495 = vsyncadd [#allocation9], %s494
          %s497 = sshll.u32 [#allocation8], 4
          %s498 = int_to_ptr.vmem [resolvable:$true] %s497
          %500 = dma.hbm_to_vmem [thread:$0]  %s5, 16, %s498, [#allocation9]
        $region32: #{a_call__.1} parent=11 // pred_fallthru
          _
        // Predicated region
        $region33: #{a_call__.1} parent=11 // pred_check
          %p501 = pneg %p180
        $region34: #{a_call__.1} parent=11 // pred_check_branch
          %503 = sbr.rel (%p501) target = $region36
        $region35: #{a_call__.1} parent=11 // pred_region
          _
        $region36: #{a_call__.1} parent=11 // pred_fallthru
          _
        // Predicated region
        $region37: #{a_call__.1} parent=11 // pred_check
          %p504 = pneg %p201
        $region38: #{a_call__.1} parent=11 // pred_check_branch
          %506 = sbr.rel (%p504) target = $region40
        $region39: #{a_call__.1} parent=11 // pred_region
          %s508 = ssub.s32 16, 16
          %509 = vsyncadd [#allocation9], %s508
          %s511 = sshll.u32 [#allocation10], 4
          %s512 = int_to_ptr.vmem [resolvable:$true] %s511
          %514 = dma.hbm_to_vmem [thread:$0]  %s7, 16, %s512, [#allocation9]
        $region40: #{a_call__.1} parent=11 // pred_fallthru
          _
        // Predicated region
        $region41: #{a_call__.1} parent=11 // pred_check
          %p515 = pneg %p222
        $region42: #{a_call__.1} parent=11 // pred_check_branch
          %517 = sbr.rel (%p515) target = $region44
        $region43: #{a_call__.1} parent=11 // pred_region
          _
        $region44: #{a_call__.1} parent=11 // pred_fallthru
          _
        // Predicated region
        $region45: #{a_call__.1} parent=11 // pred_check
          %p518 = pneg %p243
        $region46: #{a_call__.1} parent=11 // pred_check_branch
          %520 = sbr.rel (%p518) target = $region48
        $region47: #{a_call__.1} parent=11 // pred_region
          _
        $region48: #{a_call__.1} parent=11 // pred_fallthru
          _
        // Predicated region
        $region49: #{a_call__.1} parent=11 // pred_check
          %p521 = pneg %p264
        $region50: #{a_call__.1} parent=11 // pred_check_branch
          %523 = sbr.rel (%p521) target = $region52
        $region51: #{a_call__.1} parent=11 // pred_region
          _
        $region52: #{a_call__.1} parent=11 // pred_fallthru
          _
        // Predicated region
        $region53: #{a_call__.1} parent=11 // pred_check
          %p524 = pneg %p285
        $region54: #{a_call__.1} parent=11 // pred_check_branch
          %526 = sbr.rel (%p524) target = $region56
        $region55: #{a_call__.1} parent=11 // pred_region
          _
        $region56: #{a_call__.1} parent=11 // pred_fallthru
          _
        // Predicated region
        $region57: #{a_call__.1} parent=11 // pred_check
          %p527 = pneg %p306
        $region58: #{a_call__.1} parent=11 // pred_check_branch
          %529 = sbr.rel (%p527) target = $region60
        $region59: #{a_call__.1} parent=11 // pred_region
          _
        $region60: #{a_call__.1} parent=11 // pred_fallthru
          _
        // Predicated region
        $region61: #{a_call__.1} parent=11 // pred_check
          %p530 = pneg %p327
        $region62: #{a_call__.1} parent=11 // pred_check_branch
          %532 = sbr.rel (%p530) target = $region64
        $region63: #{a_call__.1} parent=11 // pred_region
          _
        $region64: #{a_call__.1} parent=11 // pred_fallthru
          _
        // Predicated region
        $region65: #{a_call__.1} parent=11 // pred_check
          %p533 = pneg %p348
        $region66: #{a_call__.1} parent=11 // pred_check_branch
          %535 = sbr.rel (%p533) target = $region68
        $region67: #{a_call__.1} parent=11 // pred_region
          %s537 = ssub.s32 768, 768
          %538 = vsyncadd [#allocation12], %s537
          %s539 = sshll.u32 [#allocation11], 4
          %s540 = int_to_ptr.vmem [resolvable:$true] %s539
          %545 = dma.hbm_to_vmem [thread:$0]  %s14, 768, %s540, [#allocation12], 128, 128, 8
        $region68: #{a_call__.1} parent=11 // pred_fallthru
          _
        // Predicated region
        $region69: #{a_call__.1} parent=11 // pred_check
          %p546 = pneg %p369
        $region70: #{a_call__.1} parent=11 // pred_check_branch
          %548 = sbr.rel (%p546) target = $region72
        $region71: #{a_call__.1} parent=11 // pred_region
          _
        $region72: #{a_call__.1} parent=11 // pred_fallthru
          _
        // Predicated region
        $region73: #{a_call__.1} parent=11 // pred_check
          %p549 = pneg %p390
        $region74: #{a_call__.1} parent=11 // pred_check_branch
          %551 = sbr.rel (%p549) target = $region76
        $region75: #{a_call__.1} parent=11 // pred_region
          _
        $region76: #{a_call__.1} parent=11 // pred_fallthru
          _
        // Predicated region
        $region77: #{a_call__.1} parent=11 // pred_check
          %p552 = pneg %p411
        $region78: #{a_call__.1} parent=11 // pred_check_branch
          %554 = sbr.rel (%p552) target = $region80
        $region79: #{a_call__.1} parent=11 // pred_region
          _
        $region80: #{a_call__.1} parent=11 // pred_fallthru
          _
      $region12: #{a_call__.1} parent=5 // pred_fallthru
        _
      %p555 = scmp.lt.s32.totalorder %s28, 8
      // Predicated region
      $region81: #{a_call__.1} parent=5 // pred_check
        %p556 = pneg %p555
      $region82: #{a_call__.1} parent=5 // pred_check_branch
        %558 = sbr.rel (%p556) target = $region84
      $region83: #{a_call__.1} parent=5 // pred_region
        // Predicated region
        $region85: #{a_call__.1} parent=83 // pred_check
          %p559 = pneg %p48
        $region86: #{a_call__.1} parent=83 // pred_check_branch
          %561 = sbr.rel (%p559) target = $region88
        $region87: #{a_call__.1} parent=83 // pred_region
          %p562 = scmp.lt.s32.totalorder %s28, 7
          %s563 = scalar_select %p562, %s28, 7
          %s564 = smul.addr %s563, 4
          %s565 = smul.addr %s564, 8
          %s566 = scalar_lea.vmem %s0, %s565
        $region88: #{a_call__.1} parent=83 // pred_fallthru
          _
      $region84: #{a_call__.1} parent=5 // pred_fallthru
        _
      %p567 = scmp.le.s32.totalorder 1, %s28
      %p568 = scmp.lt.s32.totalorder %s28, 9
      %p569 = pnand %p567, %p568
      %p570 = pneg %p569
      // Predicated region
      $region89: #{a_call__.1} parent=5 // pred_check
        _
      $region90: #{a_call__.1} parent=5 // pred_check_branch
        %572 = sbr.rel (%p569) target = $region92
      $region91: #{a_call__.1} parent=5 // pred_region
        %s573 = ssub.s32 %s28, 1
        // Predicated region
        $region93: #{a_call__.1} parent=91 // pred_check
          %p574 = pneg %p96
        $region94: #{a_call__.1} parent=91 // pred_check_branch
          %576 = sbr.rel (%p574) target = $region96
        $region95: #{a_call__.1} parent=91 // pred_region
          %577 = dma.done [#allocation4], 64
        $region96: #{a_call__.1} parent=91 // pred_fallthru
          _
        // Predicated region
        $region97: #{a_call__.1} parent=91 // pred_check
          %p578 = pneg %p117
        $region98: #{a_call__.1} parent=91 // pred_check_branch
          %580 = sbr.rel (%p578) target = $region100
        $region99: #{a_call__.1} parent=91 // pred_region
          %581 = dma.done [#allocation6], 16
        $region100: #{a_call__.1} parent=91 // pred_fallthru
          _
        // Predicated region
        $region101: #{a_call__.1} parent=91 // pred_check
          %p582 = pneg %p138
        $region102: #{a_call__.1} parent=91 // pred_check_branch
          %584 = sbr.rel (%p582) target = $region104
        $region103: #{a_call__.1} parent=91 // pred_region
          %585 = dma.done [#allocation6], 384
        $region104: #{a_call__.1} parent=91 // pred_fallthru
          _
        // Predicated region
        $region105: #{a_call__.1} parent=91 // pred_check
          %p586 = pneg %p159
        $region106: #{a_call__.1} parent=91 // pred_check_branch
          %588 = sbr.rel (%p586) target = $region108
        $region107: #{a_call__.1} parent=91 // pred_region
          %589 = dma.done [#allocation9], 16
        $region108: #{a_call__.1} parent=91 // pred_fallthru
          _
        // Predicated region
        $region109: #{a_call__.1} parent=91 // pred_check
          %p590 = pneg %p201
        $region110: #{a_call__.1} parent=91 // pred_check_branch
          %592 = sbr.rel (%p590) target = $region112
        $region111: #{a_call__.1} parent=91 // pred_region
          %593 = dma.done [#allocation9], 16
        $region112: #{a_call__.1} parent=91 // pred_fallthru
          _
        // Predicated region
        $region113: #{a_call__.1} parent=91 // pred_check
          %p594 = pneg %p348
        $region114: #{a_call__.1} parent=91 // pred_check_branch
          %596 = sbr.rel (%p594) target = $region116
        $region115: #{a_call__.1} parent=91 // pred_region
          %597 = dma.done [#allocation12], 768
        $region116: #{a_call__.1} parent=91 // pred_fallthru
          _
        %p598 = scmp.lt.s32.totalorder %s33, 7
        %s599 = scalar_select %p598, %s33, 7
        %s600 = smul.addr %s599, 4
        %s601 = smul.addr %s600, 8
        %s602 = scalar_lea.vmem %s0, %s601
        %p603 = pneg %p54
        %p604 = pneg %p51
        %p605 = pneg %p75
        %p606 = pneg %p72
        %p607 = pneg %p96
        %p608 = pneg %p93
        %p609 = pneg %p117
        %p610 = pneg %p114
        %p611 = pneg %p138
        %p612 = pneg %p135
        %p613 = pneg %p159
        %p614 = pneg %p156
        %p615 = pneg %p180
        %p616 = pneg %p177
        %p617 = pneg %p201
        %p618 = pneg %p198
        %p619 = pneg %p222
        %p620 = pneg %p219
        %p621 = pneg %p243
        %p622 = pneg %p240
        %p623 = pneg %p264
        %p624 = pneg %p261
        %p625 = pneg %p285
        %p626 = pneg %p282
        %p627 = pneg %p306
        %p628 = pneg %p303
        %p629 = pneg %p327
        %p630 = pneg %p324
        %p631 = pneg %p348
        %p632 = pneg %p345
        %p633 = pneg %p369
        %p634 = pneg %p366
        %p635 = pneg %p390
        %p636 = pneg %p387
        %p637 = pneg %p411
        %p638 = pneg %p408
        %p639 = pneg %p437
        %p640 = pneg %p434
        %p641 = scmp.lt.s32.totalorder %s33, 7
        %s642 = scalar_select %p641, %s33, 7
        %s643 = smul.addr %s642, 4
        %s644 = smul.addr %s643, 8
        %s645 = scalar_lea.vmem %s18, %s644
        %p646 = scmp.lt.s32.totalorder %s33, 7
        %s647 = scalar_select %p646, %s33, 7
        %s648 = smul.addr %s647, 4
        %s649 = smul.addr %s648, 8
        %s650 = scalar_lea.vmem %s0, %s649
        %p651 = scmp.lt.s32.totalorder %s33, 7
        %s652 = scalar_select %p651, %s33, 7
        %s653 = smul.addr %s652, 4
        %s654 = smul.addr %s653, 8
        %s655 = scalar_lea.vmem %s18, %s654
        %v656 = vld [vmem:[%s650] sm:$0xff]
        %v657 = vld [vmem:[%s650 + $0x8] sm:$0xff]
        %v658 = vld [vmem:[%s650 + $0x10] sm:$0xff]
        %v659 = vld [vmem:[%s650 + $0x18] sm:$0xff]
        %vm664 = vcmask 1040384
        %v665 = vrot.slane %v656, 7
        %v666 = vrot.slane %v657, 7
        %v667 = vsel %vm664, %v665, %v666
        %v668 = vrot.slane %v658, 7
        %v669 = vsel %vm664, %v666, %v668
        %v670 = vrot.slane %v659, 7
        %v671 = vsel %vm664, %v668, %v670
        %v674 = vsel %vm664, 0.0, %v665
        %v675 = vsel %vm664, %v670, 0.0
        %v676 = vld [vmem:[#allocation3] sm:$0xf]
        %v677 = vld [vmem:[#allocation5] sm:$0x1]
        %v679 = vlaneseq
        %v680 = vshrl.u32 %v679, 7
        %v681 = vsub.s32 0, %v680
        %v682 = vrot.slane %v677, %v681
        %vm684 = vcmask 31744
        %v686 = vsel %vm684, %v674, 0
        %v688 = vsel %vm684, %v667, 0
        %v690 = vsel %vm684, %v669, 0
        %v692 = vsel %vm684, %v671, 0
        %v695 = vsel %vm684, %v675, 0
        %vm697 = vcmask 1043456
        %v699 = vsel %vm697, %v676, 0
        %701 = vmatprep.subr.mxu0 0.0
        %702 = vmatpush1.msra.mxu0 %v699
        %703 = vmatprep.subr.mxu0 0.0
        %704 = vmatpush1.msra.mxu0 0.0
        %705 = vmatprep.subr.mxu0 0.0
        %706 = vmatpush1.msra.mxu0 0.0
        %707 = vmatprep.subr.mxu0 0.0
        %708 = vmatpush1.msra.mxu0 0.0
        %709 = vmatprep.subr.mxu0 0.0
        %710 = vmatpush1.msra.mxu0 0.0
        %711 = vmatprep.subr.mxu0 0.0
        %712 = vmatpush1.msra.mxu0 0.0
        %713 = vmatprep.subr.mxu0 0.0
        %714 = vmatpush1.msra.mxu0 0.0
        %715 = vmatprep.subr.mxu0 0.0
        %716 = vmatpush1.msra.mxu0 0.0
        %717 = vmatprep.subr.mxu0 0.0
        %718 = vmatpush1.msra.mxu0 0.0
        %719 = vmatprep.subr.mxu0 0.0
        %720 = vmatpush1.msra.mxu0 0.0
        %721 = vmatprep.subr.mxu0 0.0
        %722 = vmatpush1.msra.mxu0 0.0
        %723 = vmatprep.subr.mxu0 0.0
        %724 = vmatpush1.msra.mxu0 0.0
        %725 = vmatprep.subr.mxu0 0.0
        %726 = vmatpush1.msra.mxu0 0.0
        %727 = vmatprep.subr.mxu0 0.0
        %728 = vmatpush1.msra.mxu0 0.0
        %729 = vmatprep.subr.mxu0 0.0
        %730 = vmatpush1.msra.mxu0 0.0
        %731 = vmatprep.subr.mxu0 0.0
        %732 = vmatpush1.msra.mxu0 0.0
        %733 = vmatprep.subr.mxu0 0.0
        %734 = vmatpush1.msra.mxu0 0.0
        %735 = vmatprep.subr.mxu0 0.0
        %736 = vmatpush1.msra.mxu0 0.0
        %737 = vmatprep.subr.mxu0 0.0
        %738 = vmatpush1.msra.mxu0 0.0
        %739 = vmatprep.subr.mxu0 0.0
        %740 = vmatpush1.msra.mxu0 0.0
        %741 = vmatprep.subr.mxu0 0.0
        %742 = vmatpush1.msra.mxu0 0.0
        %743 = vmatprep.subr.mxu0 0.0
        %744 = vmatpush1.msra.mxu0 0.0
        %745 = vmatprep.subr.mxu0 0.0
        %746 = vmatpush1.msra.mxu0 0.0
        %747 = vmatprep.subr.mxu0 0.0
        %748 = vmatpush1.msra.mxu0 0.0
        %749 = vmatprep.subr.mxu0 0.0
        %750 = vmatpush1.msra.mxu0 0.0
        %751 = vmatprep.subr.mxu0 0.0
        %752 = vmatpush1.msra.mxu0 0.0
        %753 = vmatprep.subr.mxu0 0.0
        %754 = vmatpush1.msra.mxu0 0.0
        %755 = vmatprep.subr.mxu0 0.0
        %756 = vmatpush1.msra.mxu0 0.0
        %757 = vmatprep.subr.mxu0 0.0
        %758 = vmatpush1.msra.mxu0 0.0
        %759 = vmatprep.subr.mxu0 0.0
        %760 = vmatpush1.msra.mxu0 0.0
        %761 = vmatprep.subr.mxu0 0.0
        %762 = vmatpush1.msra.mxu0 0.0
        %763 = vmatprep.subr.mxu0 0.0
        %764 = vmatpush1.msra.mxu0 0.0
        %765 = vmatprep.mubr.f32.mxu0 0.0
        %766 = vmatmul.mubr.f32.gmra.mrb[0].mxu0 %v686
        %v767 = vpop.f32.mrb[0].mxu0
        %v768 = vadd.f32 %v682, %v767
        %v769 = vpop.f32.mrb[0].mxu0
        %770 = vmatprep.mubr.f32.mxu0 0.0
        %771 = vmatmul.mubr.f32.gmra.mrb[0].mxu0 %v688
        %v772 = vpop.f32.mrb[0].mxu0
        %v773 = vadd.f32 %v682, %v772
        %v774 = vpop.f32.mrb[0].mxu0
        %775 = vmatprep.mubr.f32.mxu0 0.0
        %776 = vmatmul.mubr.f32.gmra.mrb[0].mxu0 %v690
        %v777 = vpop.f32.mrb[0].mxu0
        %v778 = vadd.f32 %v682, %v777
        %v779 = vpop.f32.mrb[0].mxu0
        %780 = vmatprep.mubr.f32.mxu0 0.0
        %781 = vmatmul.mubr.f32.gmra.mrb[0].mxu0 %v692
        %v782 = vpop.f32.mrb[0].mxu0
        %v783 = vadd.f32 %v682, %v782
        %v784 = vpop.f32.mrb[0].mxu0
        %785 = vmatprep.mubr.f32.mxu0 0.0
        %786 = vmatmul.mubr.f32.gmra.mrb[0].mxu0 %v695
        %v787 = vpop.f32.mrb[0].mxu0
        %v788 = vadd.f32 %v682, %v787
        %v789 = vpop.f32.mrb[0].mxu0
        %790 = vdwg.mxu0
        %vm791 = vcmp.gt.f32.partialorder %v768, 0.0
        %vm792 = vcmp.gt.f32.partialorder %v773, 0.0
        %vm793 = vcmp.gt.f32.partialorder %v778, 0.0
        %vm794 = vcmp.gt.f32.partialorder %v783, 0.0
        %vm795 = vcmp.gt.f32.partialorder %v788, 0.0
        %v796 = vmin.f32 %v768, 0.0
        %v797 = vmin.f32 %v773, 0.0
        %v798 = vmin.f32 %v778, 0.0
        %v799 = vmin.f32 %v783, 0.0
        %v800 = vmin.f32 %v788, 0.0
        %v801 = vmul.f32 %v796, 1.442695
        %v802 = vpow.pop %v801
        %v803 = vmul.f32 %v797, 1.442695
        %v804 = vpow.pop %v803
        %v805 = vmul.f32 %v798, 1.442695
        %v806 = vpow.pop %v805
        %v807 = vmul.f32 %v799, 1.442695
        %v808 = vpow.pop %v807
        %v809 = vmul.f32 %v800, 1.442695
        %v810 = vpow.pop %v809
        %v811 = vsub.f32 %v802, 1.0
        %v812 = vsub.f32 %v804, 1.0
        %v813 = vsub.f32 %v806, 1.0
        %v814 = vsub.f32 %v808, 1.0
        %v815 = vsub.f32 %v810, 1.0
        %v816 = vsel %vm791, %v768, %v811
        %v817 = vsel %vm792, %v773, %v812
        %v818 = vsel %vm793, %v778, %v813
        %v819 = vsel %vm794, %v783, %v814
        %v820 = vsel %vm795, %v788, %v815
        %vm821 = vcmask 57344
        %822 = vst.msk [vmem:[#allocation2] sm:$0x1] %vm821, 0.0
        %vm823 = vcmask 64512
        %824 = vst.msk [vmem:[#allocation2 + $0x1] sm:$0xff] %vm823, %v816
        %825 = vst.msk [vmem:[#allocation2 + $0x9] sm:$0xff] %vm823, %v817
        %826 = vst.msk [vmem:[#allocation2 + $0x11] sm:$0xff] %vm823, %v818
        %827 = vst.msk [vmem:[#allocation2 + $0x19] sm:$0xff] %vm823, %v819
        %vm828 = vcmask 58368
        %829 = vst.msk [vmem:[#allocation2 + $0x21] sm:$0x3] %vm828, %v820
        %830 = vst.msk [vmem:[#allocation2 + $0x23] sm:$0x1] %vm821, 0.0
        %v831 = vld [vmem:[#allocation2] ss:$2 sm:$0xff]
        %s832 = scalar_lea.vmem [#allocation2], 16
        %v833 = vld [vmem:[%s832] ss:$2 sm:$0xff]
        %s834 = scalar_lea.vmem [#allocation2], 32
        %v835 = vld [vmem:[%s834] ss:$2 sm:$0x1]
        %s836 = scalar_lea.vmem [#allocation2], 1
        %v837 = vld [vmem:[%s836] ss:$2 sm:$0xff]
        %s838 = scalar_lea.vmem [#allocation2], 17
        %v839 = vld [vmem:[%s838] ss:$2 sm:$0xff]
        %s840 = scalar_lea.vmem [#allocation2], 33
        %v841 = vld [vmem:[%s840] ss:$2 sm:$0x1]
        %s842 = scalar_lea.vmem [#allocation2], 2
        %v843 = vld [vmem:[%s842] ss:$2 sm:$0xff]
        %s844 = scalar_lea.vmem [#allocation2], 18
        %v845 = vld [vmem:[%s844] ss:$2 sm:$0xff]
        %s846 = scalar_lea.vmem [#allocation2], 34
        %v847 = vld [vmem:[%s846] ss:$2 sm:$0x1]
        %851 = vrot.lane.b32.xlu0 %v837, 8
        %v852 = vpop.permute.xlu0 %851
        %853 = vrot.lane.b32.xlu0 %v839, 8
        %v854 = vpop.permute.xlu0 %853
        %855 = vrot.lane.b32.xlu0 %v841, 8
        %v856 = vpop.permute.xlu0 %855
        %863 = vrot.lane.b32.xlu0 %v843, 16
        %v864 = vpop.permute.xlu0 %863
        %865 = vrot.lane.b32.xlu0 %v845, 16
        %v866 = vpop.permute.xlu0 %865
        %867 = vrot.lane.b32.xlu0 %v847, 16
        %v868 = vpop.permute.xlu0 %867
        %v872 = vsel %vm823, %v831, %v852
        %v873 = vsel %vm823, %v833, %v854
        %v874 = vsel %vm823, %v835, %v856
        %vm875 = vcmask 130048
        %v876 = vsel %vm875, %v872, %v864
        %v877 = vsel %vm875, %v873, %v866
        %v878 = vsel %vm875, %v874, %v868
        %v879 = vld [vmem:[#allocation7] sm:$0xff]
        %v880 = vld [vmem:[#allocation7 + $0x8] sm:$0xff]
        %v881 = vld [vmem:[#allocation7 + $0x10] sm:$0xff]
        %v882 = vld [vmem:[#allocation8] sm:$0x1]
        %v884 = vlaneseq
        %v885 = vshrl.u32 %v884, 7
        %v886 = vsub.s32 0, %v885
        %v887 = vrot.slane %v882, %v886
        %vm889 = vcmask 195584
        %v891 = vsel %vm889, %v876, 0
        %v894 = vsel %vm889, %v877, 0
        %v897 = vsel %vm889, %v878, 0
        %899 = vmatprep.subr.mxu0 0.0
        %900 = vmatpush1.msra.mxu0 %v879
        %901 = vmatprep.subr.mxu0 0.0
        %902 = vmatpush1.msra.mxu0 %v880
        %903 = vmatprep.subr.mxu0 0.0
        %904 = vmatpush1.msra.mxu0 %v881
        %905 = vmatprep.subr.mxu0 0.0
        %906 = vmatpush1.msra.mxu0 0.0
        %907 = vmatprep.subr.mxu0 0.0
        %908 = vmatpush1.msra.mxu0 0.0
        %909 = vmatprep.subr.mxu0 0.0
        %910 = vmatpush1.msra.mxu0 0.0
        %911 = vmatprep.subr.mxu0 0.0
        %912 = vmatpush1.msra.mxu0 0.0
        %913 = vmatprep.subr.mxu0 0.0
        %914 = vmatpush1.msra.mxu0 0.0
        %915 = vmatprep.subr.mxu0 0.0
        %916 = vmatpush1.msra.mxu0 0.0
        %917 = vmatprep.subr.mxu0 0.0
        %918 = vmatpush1.msra.mxu0 0.0
        %919 = vmatprep.subr.mxu0 0.0
        %920 = vmatpush1.msra.mxu0 0.0
        %921 = vmatprep.subr.mxu0 0.0
        %922 = vmatpush1.msra.mxu0 0.0
        %923 = vmatprep.subr.mxu0 0.0
        %924 = vmatpush1.msra.mxu0 0.0
        %925 = vmatprep.subr.mxu0 0.0
        %926 = vmatpush1.msra.mxu0 0.0
        %927 = vmatprep.subr.mxu0 0.0
        %928 = vmatpush1.msra.mxu0 0.0
        %929 = vmatprep.subr.mxu0 0.0
        %930 = vmatpush1.msra.mxu0 0.0
        %931 = vmatprep.subr.mxu0 0.0
        %932 = vmatpush1.msra.mxu0 0.0
        %933 = vmatprep.subr.mxu0 0.0
        %934 = vmatpush1.msra.mxu0 0.0
        %935 = vmatprep.subr.mxu0 0.0
        %936 = vmatpush1.msra.mxu0 0.0
        %937 = vmatprep.subr.mxu0 0.0
        %938 = vmatpush1.msra.mxu0 0.0
        %939 = vmatprep.subr.mxu0 0.0
        %940 = vmatpush1.msra.mxu0 0.0
        %941 = vmatprep.subr.mxu0 0.0
        %942 = vmatpush1.msra.mxu0 0.0
        %943 = vmatprep.subr.mxu0 0.0
        %944 = vmatpush1.msra.mxu0 0.0
        %945 = vmatprep.subr.mxu0 0.0
        %946 = vmatpush1.msra.mxu0 0.0
        %947 = vmatprep.subr.mxu0 0.0
        %948 = vmatpush1.msra.mxu0 0.0
        %949 = vmatprep.subr.mxu0 0.0
        %950 = vmatpush1.msra.mxu0 0.0
        %951 = vmatprep.subr.mxu0 0.0
        %952 = vmatpush1.msra.mxu0 0.0
        %953 = vmatprep.subr.mxu0 0.0
        %954 = vmatpush1.msra.mxu0 0.0
        %955 = vmatprep.subr.mxu0 0.0
        %956 = vmatpush1.msra.mxu0 0.0
        %957 = vmatprep.subr.mxu0 0.0
        %958 = vmatpush1.msra.mxu0 0.0
        %959 = vmatprep.subr.mxu0 0.0
        %960 = vmatpush1.msra.mxu0 0.0
        %961 = vmatprep.subr.mxu0 0.0
        %962 = vmatpush1.msra.mxu0 0.0
        %963 = vmatprep.mubr.f32.mxu0 0.0
        %964 = vmatmul.mubr.f32.gmra.mrb[0].mxu0 %v891
        %v965 = vpop.f32.mrb[0].mxu0
        %v966 = vadd.f32 %v887, %v965
        %v967 = vpop.f32.mrb[0].mxu0
        %968 = vmatprep.mubr.f32.mxu0 0.0
        %969 = vmatmul.mubr.f32.gmra.mrb[0].mxu0 %v894
        %v970 = vpop.f32.mrb[0].mxu0
        %v971 = vadd.f32 %v887, %v970
        %v972 = vpop.f32.mrb[0].mxu0
        %973 = vmatprep.mubr.f32.mxu0 0.0
        %974 = vmatmul.mubr.f32.gmra.mrb[0].mxu0 %v897
        %v975 = vpop.f32.mrb[0].mxu0
        %v976 = vadd.f32 %v887, %v975
        %v977 = vpop.f32.mrb[0].mxu0
        %978 = vdwg.mxu0
        %vm979 = vcmp.gt.f32.partialorder %v966, 0.0
        %vm980 = vcmp.gt.f32.partialorder %v971, 0.0
        %vm981 = vcmp.gt.f32.partialorder %v976, 0.0
        %v982 = vmin.f32 %v966, 0.0
        %v983 = vmin.f32 %v971, 0.0
        %v984 = vmin.f32 %v976, 0.0
        %v985 = vmul.f32 %v982, 1.442695
        %v986 = vpow.pop %v985
        %v987 = vmul.f32 %v983, 1.442695
        %v988 = vpow.pop %v987
        %v989 = vmul.f32 %v984, 1.442695
        %v990 = vpow.pop %v989
        %v991 = vsub.f32 %v986, 1.0
        %v992 = vsub.f32 %v988, 1.0
        %v993 = vsub.f32 %v990, 1.0
        %v994 = vsel %vm979, %v966, %v991
        %v995 = vsel %vm980, %v971, %v992
        %v996 = vsel %vm981, %v976, %v993
        %v998 = vrot.slane %v994, 1
        %999 = vrot.lane.b32.xlu0 %v998, 16
        %v1000 = vpop.permute.xlu0 %999
        %v1002 = vrot.slane %v994, 2
        %1003 = vrot.lane.b32.xlu0 %v1002, 32
        %v1004 = vpop.permute.xlu0 %1003
        %v1006 = vrot.slane %v994, 3
        %1007 = vrot.lane.b32.xlu0 %v1006, 48
        %v1008 = vpop.permute.xlu0 %1007
        %v1010 = vrot.slane %v994, 4
        %1011 = vrot.lane.b32.xlu0 %v1010, 64
        %v1012 = vpop.permute.xlu0 %1011
        %vm1015 = vcmask 1042432
        %v1016 = vrot.slane %v994, 5
        %v1017 = vrot.slane %v995, 5
        %v1018 = vsel %vm1015, %v1016, %v1017
        %1019 = vrot.lane.b32.xlu0 %v1018, 80
        %v1020 = vpop.permute.xlu0 %1019
        %vm1022 = vcmask 1041408
        %v1023 = vrot.slane %v994, 6
        %v1024 = vrot.slane %v995, 6
        %v1025 = vsel %vm1022, %v1023, %v1024
        %1026 = vrot.lane.b32.xlu0 %v1025, 96
        %v1027 = vpop.permute.xlu0 %1026
        %v1029 = vrot.slane %v994, 7
        %v1030 = vrot.slane %v995, 7
        %v1031 = vsel %vm664, %v1029, %v1030
        %1032 = vrot.lane.b32.xlu0 %v1031, 112
        %v1033 = vpop.permute.xlu0 %1032
        %v1035 = vrot.slane %v995, 1
        %1036 = vrot.lane.b32.xlu0 %v1035, 16
        %v1037 = vpop.permute.xlu0 %1036
        %v1039 = vrot.slane %v995, 2
        %1040 = vrot.lane.b32.xlu0 %v1039, 32
        %v1041 = vpop.permute.xlu0 %1040
        %v1043 = vrot.slane %v995, 3
        %1044 = vrot.lane.b32.xlu0 %v1043, 48
        %v1045 = vpop.permute.xlu0 %1044
        %v1047 = vrot.slane %v995, 4
        %1048 = vrot.lane.b32.xlu0 %v1047, 64
        %v1049 = vpop.permute.xlu0 %1048
        %v1052 = vrot.slane %v996, 5
        %v1053 = vsel %vm1015, %v1017, %v1052
        %1054 = vrot.lane.b32.xlu0 %v1053, 80
        %v1055 = vpop.permute.xlu0 %1054
        %v1057 = vsel %vm875, %v994, %v1000
        %vm1058 = vcmask 261120
        %v1059 = vsel %vm1058, %v1057, %v1004
        %vm1060 = vcmask 392192
        %v1061 = vsel %vm1060, %v1059, %v1008
        %vm1062 = vcmask 523264
        %v1063 = vsel %vm1062, %v1061, %v1012
        %vm1064 = vcmask 654336
        %v1065 = vsel %vm1064, %v1063, %v1020
        %vm1066 = vcmask 785408
        %v1067 = vsel %vm1066, %v1065, %v1027
        %vm1068 = vcmask 916480
        %v1069 = vsel %vm1068, %v1067, %v1033
        %v1070 = vsel %vm875, %v995, %v1037
        %v1071 = vsel %vm1058, %v1070, %v1041
        %v1072 = vsel %vm1060, %v1071, %v1045
        %v1073 = vsel %vm1062, %v1072, %v1049
        %v1074 = vsel %vm1064, %v1073, %v1055
        %v1075 = vld [vmem:[%s6] sm:$0xff]
        %v1076 = vld [vmem:[%s6 + $0x8] sm:$0xff]
        %v1077 = vld [vmem:[%s6 + $0x10] sm:$0xff]
        %v1078 = vld [vmem:[%s6 + $0x18] sm:$0xff]
        %v1079 = vld [vmem:[%s6 + $0x20] sm:$0xff]
        %v1080 = vld [vmem:[%s6 + $0x28] sm:$0xff]
        %v1081 = vld [vmem:[%s6 + $0x30] sm:$0xff]
        %v1082 = vld [vmem:[%s6 + $0x38] sm:$0xff]
        %v1083 = vld [vmem:[%s6 + $0x40] sm:$0xff]
        %v1084 = vld [vmem:[%s6 + $0x48] sm:$0xff]
        %v1085 = vld [vmem:[%s6 + $0x50] sm:$0xff]
        %v1086 = vld [vmem:[%s6 + $0x58] sm:$0xff]
        %v1087 = vld [vmem:[%s6 + $0x60] sm:$0xff]
        %v1088 = vld [vmem:[%s6 + $0x68] sm:$0xff]
        %v1089 = vld [vmem:[%s6 + $0x70] sm:$0xff]
        %v1090 = vld [vmem:[%s6 + $0x78] sm:$0xff]
        %v1091 = vld [vmem:[%s6 + $0x80] sm:$0xff]
        %v1092 = vld [vmem:[%s6 + $0x88] sm:$0xff]
        %v1093 = vld [vmem:[%s6 + $0x90] sm:$0xff]
        %v1094 = vld [vmem:[%s6 + $0x98] sm:$0xff]
        %v1095 = vld [vmem:[%s6 + $0xa0] sm:$0xff]
        %v1096 = vld [vmem:[%s6 + $0xa8] sm:$0xff]
        %v1097 = vld [vmem:[%s6 + $0xb0] sm:$0xff]
        %v1098 = vld [vmem:[%s6 + $0xb8] sm:$0xff]
        %v1099 = vld [vmem:[%s6 + $0xc0] sm:$0xff]
        %v1100 = vld [vmem:[%s6 + $0xc8] sm:$0xff]
        %v1101 = vld [vmem:[%s6 + $0xd0] sm:$0xff]
        %v1102 = vld [vmem:[%s6 + $0xd8] sm:$0xff]
        %v1103 = vld [vmem:[#allocation10] sm:$0x1]
        %v1105 = vlaneseq
        %v1106 = vshrl.u32 %v1105, 7
        %v1107 = vsub.s32 0, %v1106
        %v1108 = vrot.slane %v1103, %v1107
        %v1111 = vsel %vm1066, %v1074, 0
        %1113 = vmatprep.subr.mxu0 0.0
        %1114 = vmatpush1.msra.mxu0 %v1075
        %1115 = vmatprep.subr.mxu0 0.0
        %1116 = vmatpush1.msra.mxu0 %v1076
        %1117 = vmatprep.subr.mxu0 0.0
        %1118 = vmatpush1.msra.mxu0 %v1077
        %1119 = vmatprep.subr.mxu0 0.0
        %1120 = vmatpush1.msra.mxu0 %v1078
        %1121 = vmatprep.subr.mxu0 0.0
        %1122 = vmatpush1.msra.mxu0 %v1079
        %1123 = vmatprep.subr.mxu0 0.0
        %1124 = vmatpush1.msra.mxu0 %v1080
        %1125 = vmatprep.subr.mxu0 0.0
        %1126 = vmatpush1.msra.mxu0 %v1081
        %1127 = vmatprep.subr.mxu0 0.0
        %1128 = vmatpush1.msra.mxu0 %v1082
        %1129 = vmatprep.subr.mxu0 0.0
        %1130 = vmatpush1.msra.mxu0 %v1083
        %1131 = vmatprep.subr.mxu0 0.0
        %1132 = vmatpush1.msra.mxu0 %v1084
        %1133 = vmatprep.subr.mxu0 0.0
        %1134 = vmatpush1.msra.mxu0 %v1085
        %1135 = vmatprep.subr.mxu0 0.0
        %1136 = vmatpush1.msra.mxu0 %v1086
        %1137 = vmatprep.subr.mxu0 0.0
        %1138 = vmatpush1.msra.mxu0 %v1087
        %1139 = vmatprep.subr.mxu0 0.0
        %1140 = vmatpush1.msra.mxu0 %v1088
        %1141 = vmatprep.subr.mxu0 0.0
        %1142 = vmatpush1.msra.mxu0 %v1089
        %1143 = vmatprep.subr.mxu0 0.0
        %1144 = vmatpush1.msra.mxu0 %v1090
        %1145 = vmatprep.subr.mxu0 0.0
        %1146 = vmatpush1.msra.mxu0 %v1091
        %1147 = vmatprep.subr.mxu0 0.0
        %1148 = vmatpush1.msra.mxu0 %v1092
        %1149 = vmatprep.subr.mxu0 0.0
        %1150 = vmatpush1.msra.mxu0 %v1093
        %1151 = vmatprep.subr.mxu0 0.0
        %1152 = vmatpush1.msra.mxu0 %v1094
        %1153 = vmatprep.subr.mxu0 0.0
        %1154 = vmatpush1.msra.mxu0 %v1095
        %1155 = vmatprep.subr.mxu0 0.0
        %1156 = vmatpush1.msra.mxu0 %v1096
        %1157 = vmatprep.subr.mxu0 0.0
        %1158 = vmatpush1.msra.mxu0 %v1097
        %1159 = vmatprep.subr.mxu0 0.0
        %1160 = vmatpush1.msra.mxu0 %v1098
        %1161 = vmatprep.subr.mxu0 0.0
        %1162 = vmatpush1.msra.mxu0 %v1099
        %1163 = vmatprep.subr.mxu0 0.0
        %1164 = vmatpush1.msra.mxu0 %v1100
        %1165 = vmatprep.subr.mxu0 0.0
        %1166 = vmatpush1.msra.mxu0 %v1101
        %1167 = vmatprep.subr.mxu0 0.0
        %1168 = vmatpush1.msra.mxu0 %v1102
        %1169 = vmatprep.subr.mxu0 0.0
        %1170 = vmatpush1.msra.mxu0 0.0
        %1171 = vmatprep.subr.mxu0 0.0
        %1172 = vmatpush1.msra.mxu0 0.0
        %1173 = vmatprep.subr.mxu0 0.0
        %1174 = vmatpush1.msra.mxu0 0.0
        %1175 = vmatprep.subr.mxu0 0.0
        %1176 = vmatpush1.msra.mxu0 0.0
        %1177 = vmatprep.mubr.f32.mxu0 %v1111
        %1178 = vmatmul.mubr.f32.gmra.mrb[0].mxu0 %v1069
        %v1179 = vpop.f32.mrb[0].mxu0
        %v1180 = vadd.f32 %v1108, %v1179
        %v1181 = vpop.f32.mrb[0].mxu0
        %1182 = vdwg.mxu0
        %vm1183 = vcmp.gt.f32.partialorder %v1180, 0.0
        %v1184 = vmin.f32 %v1180, 0.0
        %v1185 = vmul.f32 %v1184, 1.442695
        %v1186 = vpow.pop %v1185
        %v1187 = vsub.f32 %v1186, 1.0
        %v1188 = vsel %vm1183, %v1180, %v1187
        %v1189 = vld [vmem:[%s8] sm:$0xff]
        %v1190 = vld [vmem:[%s9] sm:$0x1]
        %v1192 = vlaneseq
        %v1193 = vshrl.u32 %v1192, 7
        %v1194 = vsub.s32 0, %v1193
        %v1195 = vrot.slane %v1190, %v1194
        %v1198 = vsel %vm823, %v1188, 0
        %1200 = vmatprep.subr.mxu0 0.0
        %1201 = vmatpush1.msra.mxu0 %v1189
        %1202 = vmatprep.subr.mxu0 0.0
        %1203 = vmatpush1.msra.mxu0 0.0
        %1204 = vmatprep.subr.mxu0 0.0
        %1205 = vmatpush1.msra.mxu0 0.0
        %1206 = vmatprep.subr.mxu0 0.0
        %1207 = vmatpush1.msra.mxu0 0.0
        %1208 = vmatprep.subr.mxu0 0.0
        %1209 = vmatpush1.msra.mxu0 0.0
        %1210 = vmatprep.subr.mxu0 0.0
        %1211 = vmatpush1.msra.mxu0 0.0
        %1212 = vmatprep.subr.mxu0 0.0
        %1213 = vmatpush1.msra.mxu0 0.0
        %1214 = vmatprep.subr.mxu0 0.0
        %1215 = vmatpush1.msra.mxu0 0.0
        %1216 = vmatprep.subr.mxu0 0.0
        %1217 = vmatpush1.msra.mxu0 0.0
        %1218 = vmatprep.subr.mxu0 0.0
        %1219 = vmatpush1.msra.mxu0 0.0
        %1220 = vmatprep.subr.mxu0 0.0
        %1221 = vmatpush1.msra.mxu0 0.0
        %1222 = vmatprep.subr.mxu0 0.0
        %1223 = vmatpush1.msra.mxu0 0.0
        %1224 = vmatprep.subr.mxu0 0.0
        %1225 = vmatpush1.msra.mxu0 0.0
        %1226 = vmatprep.subr.mxu0 0.0
        %1227 = vmatpush1.msra.mxu0 0.0
        %1228 = vmatprep.subr.mxu0 0.0
        %1229 = vmatpush1.msra.mxu0 0.0
        %1230 = vmatprep.subr.mxu0 0.0
        %1231 = vmatpush1.msra.mxu0 0.0
        %1232 = vmatprep.subr.mxu0 0.0
        %1233 = vmatpush1.msra.mxu0 0.0
        %1234 = vmatprep.subr.mxu0 0.0
        %1235 = vmatpush1.msra.mxu0 0.0
        %1236 = vmatprep.subr.mxu0 0.0
        %1237 = vmatpush1.msra.mxu0 0.0
        %1238 = vmatprep.subr.mxu0 0.0
        %1239 = vmatpush1.msra.mxu0 0.0
        %1240 = vmatprep.subr.mxu0 0.0
        %1241 = vmatpush1.msra.mxu0 0.0
        %1242 = vmatprep.subr.mxu0 0.0
        %1243 = vmatpush1.msra.mxu0 0.0
        %1244 = vmatprep.subr.mxu0 0.0
        %1245 = vmatpush1.msra.mxu0 0.0
        %1246 = vmatprep.subr.mxu0 0.0
        %1247 = vmatpush1.msra.mxu0 0.0
        %1248 = vmatprep.subr.mxu0 0.0
        %1249 = vmatpush1.msra.mxu0 0.0
        %1250 = vmatprep.subr.mxu0 0.0
        %1251 = vmatpush1.msra.mxu0 0.0
        %1252 = vmatprep.subr.mxu0 0.0
        %1253 = vmatpush1.msra.mxu0 0.0
        %1254 = vmatprep.subr.mxu0 0.0
        %1255 = vmatpush1.msra.mxu0 0.0
        %1256 = vmatprep.subr.mxu0 0.0
        %1257 = vmatpush1.msra.mxu0 0.0
        %1258 = vmatprep.subr.mxu0 0.0
        %1259 = vmatpush1.msra.mxu0 0.0
        %1260 = vmatprep.subr.mxu0 0.0
        %1261 = vmatpush1.msra.mxu0 0.0
        %1262 = vmatprep.subr.mxu0 0.0
        %1263 = vmatpush1.msra.mxu0 0.0
        %1264 = vmatprep.mubr.f32.mxu0 0.0
        %1265 = vmatmul.mubr.f32.gmra.mrb[0].mxu0 %v1198
        %v1266 = vpop.f32.mrb[0].mxu0
        %v1267 = vadd.f32 %v1195, %v1266
        %v1268 = vpop.f32.mrb[0].mxu0
        %1269 = vdwg.mxu0
        %v1270 = vld [vmem:[%s10] sm:$0xf]
        %v1271 = vld [vmem:[%s11] sm:$0x1]
        %v1273 = vlaneseq
        %v1274 = vshrl.u32 %v1273, 7
        %v1275 = vsub.s32 0, %v1274
        %v1276 = vrot.slane %v1271, %v1275
        %v1279 = vsel %vm684, %v1267, 0
        %v1282 = vsel %vm697, %v1270, 0
        %1284 = vmatprep.subr.mxu0 0.0
        %1285 = vmatpush1.msra.mxu0 %v1282
        %1286 = vmatprep.subr.mxu0 0.0
        %1287 = vmatpush1.msra.mxu0 0.0
        %1288 = vmatprep.subr.mxu0 0.0
        %1289 = vmatpush1.msra.mxu0 0.0
        %1290 = vmatprep.subr.mxu0 0.0
        %1291 = vmatpush1.msra.mxu0 0.0
        %1292 = vmatprep.subr.mxu0 0.0
        %1293 = vmatpush1.msra.mxu0 0.0
        %1294 = vmatprep.subr.mxu0 0.0
        %1295 = vmatpush1.msra.mxu0 0.0
        %1296 = vmatprep.subr.mxu0 0.0
        %1297 = vmatpush1.msra.mxu0 0.0
        %1298 = vmatprep.subr.mxu0 0.0
        %1299 = vmatpush1.msra.mxu0 0.0
        %1300 = vmatprep.subr.mxu0 0.0
        %1301 = vmatpush1.msra.mxu0 0.0
        %1302 = vmatprep.subr.mxu0 0.0
        %1303 = vmatpush1.msra.mxu0 0.0
        %1304 = vmatprep.subr.mxu0 0.0
        %1305 = vmatpush1.msra.mxu0 0.0
        %1306 = vmatprep.subr.mxu0 0.0
        %1307 = vmatpush1.msra.mxu0 0.0
        %1308 = vmatprep.subr.mxu0 0.0
        %1309 = vmatpush1.msra.mxu0 0.0
        %1310 = vmatprep.subr.mxu0 0.0
        %1311 = vmatpush1.msra.mxu0 0.0
        %1312 = vmatprep.subr.mxu0 0.0
        %1313 = vmatpush1.msra.mxu0 0.0
        %1314 = vmatprep.subr.mxu0 0.0
        %1315 = vmatpush1.msra.mxu0 0.0
        %1316 = vmatprep.subr.mxu0 0.0
        %1317 = vmatpush1.msra.mxu0 0.0
        %1318 = vmatprep.subr.mxu0 0.0
        %1319 = vmatpush1.msra.mxu0 0.0
        %1320 = vmatprep.subr.mxu0 0.0
        %1321 = vmatpush1.msra.mxu0 0.0
        %1322 = vmatprep.subr.mxu0 0.0
        %1323 = vmatpush1.msra.mxu0 0.0
        %1324 = vmatprep.subr.mxu0 0.0
        %1325 = vmatpush1.msra.mxu0 0.0
        %1326 = vmatprep.subr.mxu0 0.0
        %1327 = vmatpush1.msra.mxu0 0.0
        %1328 = vmatprep.subr.mxu0 0.0
        %1329 = vmatpush1.msra.mxu0 0.0
        %1330 = vmatprep.subr.mxu0 0.0
        %1331 = vmatpush1.msra.mxu0 0.0
        %1332 = vmatprep.subr.mxu0 0.0
        %1333 = vmatpush1.msra.mxu0 0.0
        %1334 = vmatprep.subr.mxu0 0.0
        %1335 = vmatpush1.msra.mxu0 0.0
        %1336 = vmatprep.subr.mxu0 0.0
        %1337 = vmatpush1.msra.mxu0 0.0
        %1338 = vmatprep.subr.mxu0 0.0
        %1339 = vmatpush1.msra.mxu0 0.0
        %1340 = vmatprep.subr.mxu0 0.0
        %1341 = vmatpush1.msra.mxu0 0.0
        %1342 = vmatprep.subr.mxu0 0.0
        %1343 = vmatpush1.msra.mxu0 0.0
        %1344 = vmatprep.subr.mxu0 0.0
        %1345 = vmatpush1.msra.mxu0 0.0
        %1346 = vmatprep.subr.mxu0 0.0
        %1347 = vmatpush1.msra.mxu0 0.0
        %1348 = vmatprep.mubr.f32.mxu0 0.0
        %1349 = vmatmul.mubr.f32.gmra.mrb[0].mxu0 %v1279
        %v1350 = vpop.f32.mrb[0].mxu0
        %v1351 = vadd.f32 %v1276, %v1350
        %v1352 = vpop.f32.mrb[0].mxu0
        %1353 = vdwg.mxu0
        %vm1354 = vcmp.gt.f32.partialorder %v1351, 0.0
        %v1355 = vmin.f32 %v1351, 0.0
        %v1356 = vmul.f32 %v1355, 1.442695
        %v1357 = vpow.pop %v1356
        %v1358 = vsub.f32 %v1357, 1.0
        %v1359 = vsel %vm1354, %v1351, %v1358
        %v1361 = vrot.slane %v1359, 3
        %vm1363 = vcmask 1044480
        %v1364 = vsel %vm1363, 0.0, %v1361
        %v1365 = vsel %vm664, %v1361, 0.0
        %vm1369 = vcmask 1046528
        %v1370 = vrot.slane 0.0, 1
        %v1371 = vrot.slane %v1364, 1
        %v1372 = vsel %vm1369, %v1370, %v1371
        %v1373 = vrot.slane %v1365, 1
        %v1374 = vsel %vm1369, %v1371, %v1373
        %1375 = vrot.lane.b32.xlu0 %v1372, 8
        %v1376 = vpop.permute.xlu0 %1375
        %1377 = vrot.lane.b32.xlu0 %v1374, 8
        %v1378 = vpop.permute.xlu0 %1377
        %1379 = vrot.lane.b32.xlu0 %v1373, 8
        %v1380 = vpop.permute.xlu0 %1379
        %vm1384 = vcmask 1045504
        %v1385 = vrot.slane 0.0, 2
        %v1386 = vrot.slane %v1364, 2
        %v1387 = vsel %vm1384, %v1385, %v1386
        %v1388 = vrot.slane %v1365, 2
        %v1389 = vsel %vm1384, %v1386, %v1388
        %1390 = vrot.lane.b32.xlu0 %v1387, 16
        %v1391 = vpop.permute.xlu0 %1390
        %1392 = vrot.lane.b32.xlu0 %v1389, 16
        %v1393 = vpop.permute.xlu0 %1392
        %1394 = vrot.lane.b32.xlu0 %v1388, 16
        %v1395 = vpop.permute.xlu0 %1394
        %v1399 = vrot.slane 0.0, 3
        %v1400 = vrot.slane %v1364, 3
        %v1401 = vsel %vm1363, %v1399, %v1400
        %v1402 = vrot.slane %v1365, 3
        %v1403 = vsel %vm1363, %v1400, %v1402
        %1404 = vrot.lane.b32.xlu0 %v1401, 24
        %v1405 = vpop.permute.xlu0 %1404
        %1406 = vrot.lane.b32.xlu0 %v1403, 24
        %v1407 = vpop.permute.xlu0 %1406
        %1408 = vrot.lane.b32.xlu0 %v1402, 24
        %v1409 = vpop.permute.xlu0 %1408
        %v1413 = vrot.slane 0.0, 4
        %v1414 = vrot.slane %v1364, 4
        %v1415 = vsel %vm697, %v1413, %v1414
        %v1416 = vrot.slane %v1365, 4
        %v1417 = vsel %vm697, %v1414, %v1416
        %1418 = vrot.lane.b32.xlu0 %v1415, 32
        %v1419 = vpop.permute.xlu0 %1418
        %1420 = vrot.lane.b32.xlu0 %v1417, 32
        %v1421 = vpop.permute.xlu0 %1420
        %1422 = vrot.lane.b32.xlu0 %v1416, 32
        %v1423 = vpop.permute.xlu0 %1422
        %v1427 = vrot.slane 0.0, 5
        %v1428 = vrot.slane %v1364, 5
        %v1429 = vsel %vm1015, %v1427, %v1428
        %v1430 = vrot.slane %v1365, 5
        %v1431 = vsel %vm1015, %v1428, %v1430
        %1432 = vrot.lane.b32.xlu0 %v1429, 40
        %v1433 = vpop.permute.xlu0 %1432
        %1434 = vrot.lane.b32.xlu0 %v1431, 40
        %v1435 = vpop.permute.xlu0 %1434
        %1436 = vrot.lane.b32.xlu0 %v1430, 40
        %v1437 = vpop.permute.xlu0 %1436
        %v1441 = vrot.slane 0.0, 6
        %v1442 = vrot.slane %v1364, 6
        %v1443 = vsel %vm1022, %v1441, %v1442
        %v1444 = vrot.slane %v1365, 6
        %v1445 = vsel %vm1022, %v1442, %v1444
        %1446 = vrot.lane.b32.xlu0 %v1443, 48
        %v1447 = vpop.permute.xlu0 %1446
        %1448 = vrot.lane.b32.xlu0 %v1445, 48
        %v1449 = vpop.permute.xlu0 %1448
        %1450 = vrot.lane.b32.xlu0 %v1444, 48
        %v1451 = vpop.permute.xlu0 %1450
        %v1455 = vrot.slane 0.0, 7
        %v1456 = vrot.slane %v1364, 7
        %v1457 = vsel %vm664, %v1455, %v1456
        %v1458 = vrot.slane %v1365, 7
        %v1459 = vsel %vm664, %v1456, %v1458
        %1460 = vrot.lane.b32.xlu0 %v1457, 56
        %v1461 = vpop.permute.xlu0 %1460
        %1462 = vrot.lane.b32.xlu0 %v1459, 56
        %v1463 = vpop.permute.xlu0 %1462
        %1464 = vrot.lane.b32.xlu0 %v1458, 56
        %v1465 = vpop.permute.xlu0 %1464
        %1469 = vrot.lane.b32.xlu0 %v1364, 64
        %v1470 = vpop.permute.xlu0 %1469
        %1471 = vrot.lane.b32.xlu0 %v1365, 64
        %v1472 = vpop.permute.xlu0 %1471
        %1473 = vrot.lane.b32.xlu0 0.0, 64
        %v1474 = vpop.permute.xlu0 %1473
        %v1478 = vsel %vm1369, %v1373, %v1370
        %1479 = vrot.lane.b32.xlu0 %v1374, 72
        %v1480 = vpop.permute.xlu0 %1479
        %1481 = vrot.lane.b32.xlu0 %v1478, 72
        %v1482 = vpop.permute.xlu0 %1481
        %1483 = vrot.lane.b32.xlu0 %v1370, 72
        %v1484 = vpop.permute.xlu0 %1483
        %v1488 = vsel %vm1384, %v1388, %v1385
        %1489 = vrot.lane.b32.xlu0 %v1389, 80
        %v1490 = vpop.permute.xlu0 %1489
        %1491 = vrot.lane.b32.xlu0 %v1488, 80
        %v1492 = vpop.permute.xlu0 %1491
        %1493 = vrot.lane.b32.xlu0 %v1385, 80
        %v1494 = vpop.permute.xlu0 %1493
        %v1498 = vsel %vm1363, %v1402, %v1399
        %1499 = vrot.lane.b32.xlu0 %v1403, 88
        %v1500 = vpop.permute.xlu0 %1499
        %1501 = vrot.lane.b32.xlu0 %v1498, 88
        %v1502 = vpop.permute.xlu0 %1501
        %1503 = vrot.lane.b32.xlu0 %v1399, 88
        %v1504 = vpop.permute.xlu0 %1503
        %v1508 = vsel %vm697, %v1416, %v1413
        %1509 = vrot.lane.b32.xlu0 %v1417, 96
        %v1510 = vpop.permute.xlu0 %1509
        %1511 = vrot.lane.b32.xlu0 %v1508, 96
        %v1512 = vpop.permute.xlu0 %1511
        %1513 = vrot.lane.b32.xlu0 %v1413, 96
        %v1514 = vpop.permute.xlu0 %1513
        %v1518 = vsel %vm1015, %v1430, %v1427
        %1519 = vrot.lane.b32.xlu0 %v1431, 104
        %v1520 = vpop.permute.xlu0 %1519
        %1521 = vrot.lane.b32.xlu0 %v1518, 104
        %v1522 = vpop.permute.xlu0 %1521
        %1523 = vrot.lane.b32.xlu0 %v1427, 104
        %v1524 = vpop.permute.xlu0 %1523
        %v1528 = vsel %vm823, 0.0, %v1376
        %v1529 = vsel %vm823, %v1364, %v1378
        %v1530 = vsel %vm823, %v1365, %v1380
        %v1531 = vsel %vm875, %v1528, %v1391
        %v1532 = vsel %vm875, %v1529, %v1393
        %v1533 = vsel %vm875, %v1530, %v1395
        %v1534 = vsel %vm889, %v1531, %v1405
        %v1535 = vsel %vm889, %v1532, %v1407
        %v1536 = vsel %vm889, %v1533, %v1409
        %v1537 = vsel %vm1058, %v1534, %v1419
        %v1538 = vsel %vm1058, %v1535, %v1421
        %v1539 = vsel %vm1058, %v1536, %v1423
        %vm1540 = vcmask 326656
        %v1541 = vsel %vm1540, %v1537, %v1433
        %v1542 = vsel %vm1540, %v1538, %v1435
        %v1543 = vsel %vm1540, %v1539, %v1437
        %v1544 = vsel %vm1060, %v1541, %v1447
        %v1545 = vsel %vm1060, %v1542, %v1449
        %v1546 = vsel %vm1060, %v1543, %v1451
        %vm1547 = vcmask 457728
        %v1548 = vsel %vm1547, %v1544, %v1461
        %v1549 = vsel %vm1547, %v1545, %v1463
        %v1550 = vsel %vm1547, %v1546, %v1465
        %v1551 = vsel %vm1062, %v1548, %v1470
        %v1552 = vsel %vm1062, %v1549, %v1472
        %v1553 = vsel %vm1062, %v1550, %v1474
        %vm1554 = vcmask 588800
        %v1555 = vsel %vm1554, %v1551, %v1480
        %v1556 = vsel %vm1554, %v1552, %v1482
        %v1557 = vsel %vm1554, %v1553, %v1484
        %v1558 = vsel %vm1064, %v1555, %v1490
        %v1559 = vsel %vm1064, %v1556, %v1492
        %v1560 = vsel %vm1064, %v1557, %v1494
        %vm1561 = vcmask 719872
        %v1562 = vsel %vm1561, %v1558, %v1500
        %v1563 = vsel %vm1561, %v1559, %v1502
        %v1564 = vsel %vm1561, %v1560, %v1504
        %v1565 = vsel %vm1066, %v1562, %v1510
        %v1566 = vsel %vm1066, %v1563, %v1512
        %v1567 = vsel %vm1066, %v1564, %v1514
        %vm1568 = vcmask 850944
        %v1569 = vsel %vm1568, %v1565, %v1520
        %v1570 = vsel %vm1568, %v1566, %v1522
        %v1571 = vsel %vm1568, %v1567, %v1524
        %v1572 = vld [vmem:[%s12] sm:$0xff]
        %v1573 = vld [vmem:[%s12 + $0x8] sm:$0xff]
        %v1574 = vld [vmem:[%s12 + $0x10] sm:$0xff]
        %v1575 = vld [vmem:[%s12 + $0x18] sm:$0xff]
        %v1576 = vld [vmem:[%s12 + $0x20] sm:$0xff]
        %v1577 = vld [vmem:[%s12 + $0x28] sm:$0xff]
        %v1578 = vld [vmem:[%s12 + $0x30] sm:$0xff]
        %v1579 = vld [vmem:[%s12 + $0x38] sm:$0xff]
        %v1580 = vld [vmem:[%s12 + $0x40] sm:$0xff]
        %v1581 = vld [vmem:[%s12 + $0x48] sm:$0xff]
        %v1582 = vld [vmem:[%s12 + $0x50] sm:$0xff]
        %v1583 = vld [vmem:[%s12 + $0x58] sm:$0xff]
        %v1584 = vld [vmem:[%s12 + $0x60] sm:$0xff]
        %v1585 = vld [vmem:[%s12 + $0x68] sm:$0xff]
        %v1586 = vld [vmem:[%s13] sm:$0x1]
        %v1588 = vlaneseq
        %v1589 = vshrl.u32 %v1588, 7
        %v1590 = vsub.s32 0, %v1589
        %v1591 = vrot.slane %v1586, %v1590
        %v1594 = vsel %vm1068, %v1569, 0
        %v1597 = vsel %vm1068, %v1570, 0
        %v1600 = vsel %vm1068, %v1571, 0
        %1602 = vmatprep.subr.mxu0 0.0
        %1603 = vmatpush1.msra.mxu0 %v1572
        %1604 = vmatprep.subr.mxu0 0.0
        %1605 = vmatpush1.msra.mxu0 %v1573
        %1606 = vmatprep.subr.mxu0 0.0
        %1607 = vmatpush1.msra.mxu0 %v1574
        %1608 = vmatprep.subr.mxu0 0.0
        %1609 = vmatpush1.msra.mxu0 %v1575
        %1610 = vmatprep.subr.mxu0 0.0
        %1611 = vmatpush1.msra.mxu0 %v1576
        %1612 = vmatprep.subr.mxu0 0.0
        %1613 = vmatpush1.msra.mxu0 %v1577
        %1614 = vmatprep.subr.mxu0 0.0
        %1615 = vmatpush1.msra.mxu0 %v1578
        %1616 = vmatprep.subr.mxu0 0.0
        %1617 = vmatpush1.msra.mxu0 %v1579
        %1618 = vmatprep.subr.mxu0 0.0
        %1619 = vmatpush1.msra.mxu0 %v1580
        %1620 = vmatprep.subr.mxu0 0.0
        %1621 = vmatpush1.msra.mxu0 %v1581
        %1622 = vmatprep.subr.mxu0 0.0
        %1623 = vmatpush1.msra.mxu0 %v1582
        %1624 = vmatprep.subr.mxu0 0.0
        %1625 = vmatpush1.msra.mxu0 %v1583
        %1626 = vmatprep.subr.mxu0 0.0
        %1627 = vmatpush1.msra.mxu0 %v1584
        %1628 = vmatprep.subr.mxu0 0.0
        %1629 = vmatpush1.msra.mxu0 %v1585
        %1630 = vmatprep.subr.mxu0 0.0
        %1631 = vmatpush1.msra.mxu0 0.0
        %1632 = vmatprep.subr.mxu0 0.0
        %1633 = vmatpush1.msra.mxu0 0.0
        %1634 = vmatprep.subr.mxu0 0.0
        %1635 = vmatpush1.msra.mxu0 0.0
        %1636 = vmatprep.subr.mxu0 0.0
        %1637 = vmatpush1.msra.mxu0 0.0
        %1638 = vmatprep.subr.mxu0 0.0
        %1639 = vmatpush1.msra.mxu0 0.0
        %1640 = vmatprep.subr.mxu0 0.0
        %1641 = vmatpush1.msra.mxu0 0.0
        %1642 = vmatprep.subr.mxu0 0.0
        %1643 = vmatpush1.msra.mxu0 0.0
        %1644 = vmatprep.subr.mxu0 0.0
        %1645 = vmatpush1.msra.mxu0 0.0
        %1646 = vmatprep.subr.mxu0 0.0
        %1647 = vmatpush1.msra.mxu0 0.0
        %1648 = vmatprep.subr.mxu0 0.0
        %1649 = vmatpush1.msra.mxu0 0.0
        %1650 = vmatprep.subr.mxu0 0.0
        %1651 = vmatpush1.msra.mxu0 0.0
        %1652 = vmatprep.subr.mxu0 0.0
        %1653 = vmatpush1.msra.mxu0 0.0
        %1654 = vmatprep.subr.mxu0 0.0
        %1655 = vmatpush1.msra.mxu0 0.0
        %1656 = vmatprep.subr.mxu0 0.0
        %1657 = vmatpush1.msra.mxu0 0.0
        %1658 = vmatprep.subr.mxu0 0.0
        %1659 = vmatpush1.msra.mxu0 0.0
        %1660 = vmatprep.subr.mxu0 0.0
        %1661 = vmatpush1.msra.mxu0 0.0
        %1662 = vmatprep.subr.mxu0 0.0
        %1663 = vmatpush1.msra.mxu0 0.0
        %1664 = vmatprep.subr.mxu0 0.0
        %1665 = vmatpush1.msra.mxu0 0.0
        %1666 = vmatprep.mubr.f32.mxu0 0.0
        %1667 = vmatmul.mubr.f32.gmra.mrb[0].mxu0 %v1594
        %v1668 = vpop.f32.mrb[0].mxu0
        %v1669 = vadd.f32 %v1591, %v1668
        %v1670 = vpop.f32.mrb[0].mxu0
        %1671 = vmatprep.mubr.f32.mxu0 0.0
        %1672 = vmatmul.mubr.f32.gmra.mrb[0].mxu0 %v1597
        %v1673 = vpop.f32.mrb[0].mxu0
        %v1674 = vadd.f32 %v1591, %v1673
        %v1675 = vpop.f32.mrb[0].mxu0
        %1676 = vmatprep.mubr.f32.mxu0 0.0
        %1677 = vmatmul.mubr.f32.gmra.mrb[0].mxu0 %v1600
        %v1678 = vpop.f32.mrb[0].mxu0
        %v1679 = vadd.f32 %v1591, %v1678
        %v1680 = vpop.f32.mrb[0].mxu0
        %1681 = vdwg.mxu0
        %vm1682 = vcmp.gt.f32.partialorder %v1669, 0.0
        %vm1683 = vcmp.gt.f32.partialorder %v1674, 0.0
        %vm1684 = vcmp.gt.f32.partialorder %v1679, 0.0
        %v1685 = vmin.f32 %v1669, 0.0
        %v1686 = vmin.f32 %v1674, 0.0
        %v1687 = vmin.f32 %v1679, 0.0
        %v1688 = vmul.f32 %v1685, 1.442695
        %v1689 = vpow.pop %v1688
        %v1690 = vmul.f32 %v1686, 1.442695
        %v1691 = vpow.pop %v1690
        %v1692 = vmul.f32 %v1687, 1.442695
        %v1693 = vpow.pop %v1692
        %v1694 = vsub.f32 %v1689, 1.0
        %v1695 = vsub.f32 %v1691, 1.0
        %v1696 = vsub.f32 %v1693, 1.0
        %v1697 = vsel %vm1682, %v1669, %v1694
        %v1698 = vsel %vm1683, %v1674, %v1695
        %v1699 = vsel %vm1684, %v1679, %v1696
        %v1700 = vld [vmem:[%s1] sm:$0xff]
        %v1701 = vld [vmem:[%s1 + $0x8] sm:$0xff]
        %v1702 = vld [vmem:[%s1 + $0x10] sm:$0xff]
        %v1703 = vld [vmem:[%s1 + $0x18] sm:$0xff]
        %v1704 = vld [vmem:[%s1 + $0x20] sm:$0xf]
        %vm1705 = vcmask 138240
        %v1707 = vsel %vm1705, %v1700, 0
        %v1710 = vsel %vm1705, %v1701, 0
        %v1713 = vsel %vm1705, %v1702, 0
        %v1716 = vsel %vm1705, %v1703, 0
        %v1719 = vsel %vm1705, %v1704, 0
        %v1722 = vsel %vm664, %v1699, 0
        %1724 = vmatprep.subr.mxu0 0.0
        %1725 = vmatpush1.msra.mxu0 %v1697
        %1726 = vmatprep.subr.mxu0 0.0
        %1727 = vmatpush1.msra.mxu0 %v1698
        %1728 = vmatprep.subr.mxu0 0.0
        %1729 = vmatpush1.msra.mxu0 %v1722
        %1730 = vmatprep.subr.mxu0 0.0
        %1731 = vmatpush1.msra.mxu0 0.0
        %1732 = vmatprep.subr.mxu0 0.0
        %1733 = vmatpush1.msra.mxu0 0.0
        %1734 = vmatprep.subr.mxu0 0.0
        %1735 = vmatpush1.msra.mxu0 0.0
        %1736 = vmatprep.subr.mxu0 0.0
        %1737 = vmatpush1.msra.mxu0 0.0
        %1738 = vmatprep.subr.mxu0 0.0
        %1739 = vmatpush1.msra.mxu0 0.0
        %1740 = vmatprep.subr.mxu0 0.0
        %1741 = vmatpush1.msra.mxu0 0.0
        %1742 = vmatprep.subr.mxu0 0.0
        %1743 = vmatpush1.msra.mxu0 0.0
        %1744 = vmatprep.subr.mxu0 0.0
        %1745 = vmatpush1.msra.mxu0 0.0
        %1746 = vmatprep.subr.mxu0 0.0
        %1747 = vmatpush1.msra.mxu0 0.0
        %1748 = vmatprep.subr.mxu0 0.0
        %1749 = vmatpush1.msra.mxu0 0.0
        %1750 = vmatprep.subr.mxu0 0.0
        %1751 = vmatpush1.msra.mxu0 0.0
        %1752 = vmatprep.subr.mxu0 0.0
        %1753 = vmatpush1.msra.mxu0 0.0
        %1754 = vmatprep.subr.mxu0 0.0
        %1755 = vmatpush1.msra.mxu0 0.0
        %1756 = vmatprep.subr.mxu0 0.0
        %1757 = vmatpush1.msra.mxu0 0.0
        %1758 = vmatprep.subr.mxu0 0.0
        %1759 = vmatpush1.msra.mxu0 0.0
        %1760 = vmatprep.subr.mxu0 0.0
        %1761 = vmatpush1.msra.mxu0 0.0
        %1762 = vmatprep.subr.mxu0 0.0
        %1763 = vmatpush1.msra.mxu0 0.0
        %1764 = vmatprep.subr.mxu0 0.0
        %1765 = vmatpush1.msra.mxu0 0.0
        %1766 = vmatprep.subr.mxu0 0.0
        %1767 = vmatpush1.msra.mxu0 0.0
        %1768 = vmatprep.subr.mxu0 0.0
        %1769 = vmatpush1.msra.mxu0 0.0
        %1770 = vmatprep.subr.mxu0 0.0
        %1771 = vmatpush1.msra.mxu0 0.0
        %1772 = vmatprep.subr.mxu0 0.0
        %1773 = vmatpush1.msra.mxu0 0.0
        %1774 = vmatprep.subr.mxu0 0.0
        %1775 = vmatpush1.msra.mxu0 0.0
        %1776 = vmatprep.subr.mxu0 0.0
        %1777 = vmatpush1.msra.mxu0 0.0
        %1778 = vmatprep.subr.mxu0 0.0
        %1779 = vmatpush1.msra.mxu0 0.0
        %1780 = vmatprep.subr.mxu0 0.0
        %1781 = vmatpush1.msra.mxu0 0.0
        %1782 = vmatprep.subr.mxu0 0.0
        %1783 = vmatpush1.msra.mxu0 0.0
        %1784 = vmatprep.subr.mxu0 0.0
        %1785 = vmatpush1.msra.mxu0 0.0
        %1786 = vmatprep.subr.mxu0 0.0
        %1787 = vmatpush1.msra.mxu0 0.0
        %1788 = vmatprep.mubr.f32.mxu0 0.0
        %1789 = vmatmul.mubr.f32.gmra.mrb[0].mxu0 %v1707
        %v1790 = vpop.f32.mrb[0].mxu0
        %v1791 = vadd.f32 0.0, %v1790
        %v1792 = vpop.f32.mrb[0].mxu0
        %1793 = vmatprep.mubr.f32.mxu0 0.0
        %1794 = vmatmul.mubr.f32.gmra.mrb[0].mxu0 %v1710
        %v1795 = vpop.f32.mrb[0].mxu0
        %v1796 = vadd.f32 0.0, %v1795
        %v1797 = vpop.f32.mrb[0].mxu0
        %1798 = vmatprep.mubr.f32.mxu0 0.0
        %1799 = vmatmul.mubr.f32.gmra.mrb[0].mxu0 %v1713
        %v1800 = vpop.f32.mrb[0].mxu0
        %v1801 = vadd.f32 0.0, %v1800
        %v1802 = vpop.f32.mrb[0].mxu0
        %1803 = vmatprep.mubr.f32.mxu0 0.0
        %1804 = vmatmul.mubr.f32.gmra.mrb[0].mxu0 %v1716
        %v1805 = vpop.f32.mrb[0].mxu0
        %v1806 = vadd.f32 0.0, %v1805
        %v1807 = vpop.f32.mrb[0].mxu0
        %1808 = vmatprep.mubr.f32.mxu0 0.0
        %1809 = vmatmul.mubr.f32.gmra.mrb[0].mxu0 %v1719
        %v1810 = vpop.f32.mrb[0].mxu0
        %v1811 = vadd.f32 0.0, %v1810
        %v1812 = vpop.f32.mrb[0].mxu0
        %1813 = vdwg.mxu0
        %v1819 = vrot.slane %v1791, 1
        %v1820 = vrot.slane %v1796, 1
        %v1821 = vsel %vm1369, %v1819, %v1820
        %v1822 = vrot.slane %v1801, 1
        %v1823 = vsel %vm1369, %v1820, %v1822
        %v1824 = vrot.slane %v1806, 1
        %v1825 = vsel %vm1369, %v1822, %v1824
        %v1826 = vrot.slane %v1811, 1
        %v1827 = vsel %vm1369, %v1824, %v1826
        %1828 = vrot.lane.b32.xlu0 %v1821, 16
        %v1829 = vpop.permute.xlu0 %1828
        %1830 = vrot.lane.b32.xlu0 %v1823, 16
        %v1831 = vpop.permute.xlu0 %1830
        %1832 = vrot.lane.b32.xlu0 %v1825, 16
        %v1833 = vpop.permute.xlu0 %1832
        %1834 = vrot.lane.b32.xlu0 %v1827, 16
        %v1835 = vpop.permute.xlu0 %1834
        %1836 = vrot.lane.b32.xlu0 %v1826, 16
        %v1837 = vpop.permute.xlu0 %1836
        %v1843 = vrot.slane %v1791, 2
        %v1844 = vrot.slane %v1796, 2
        %v1845 = vsel %vm1384, %v1843, %v1844
        %v1846 = vrot.slane %v1801, 2
        %v1847 = vsel %vm1384, %v1844, %v1846
        %v1848 = vrot.slane %v1806, 2
        %v1849 = vsel %vm1384, %v1846, %v1848
        %v1850 = vrot.slane %v1811, 2
        %v1851 = vsel %vm1384, %v1848, %v1850
        %1852 = vrot.lane.b32.xlu0 %v1845, 32
        %v1853 = vpop.permute.xlu0 %1852
        %1854 = vrot.lane.b32.xlu0 %v1847, 32
        %v1855 = vpop.permute.xlu0 %1854
        %1856 = vrot.lane.b32.xlu0 %v1849, 32
        %v1857 = vpop.permute.xlu0 %1856
        %1858 = vrot.lane.b32.xlu0 %v1851, 32
        %v1859 = vpop.permute.xlu0 %1858
        %1860 = vrot.lane.b32.xlu0 %v1850, 32
        %v1861 = vpop.permute.xlu0 %1860
        %v1867 = vsel %vm875, %v1791, %v1829
        %v1868 = vsel %vm875, %v1796, %v1831
        %v1869 = vsel %vm875, %v1801, %v1833
        %v1870 = vsel %vm875, %v1806, %v1835
        %v1871 = vsel %vm875, %v1811, %v1837
        %v1872 = vsel %vm1058, %v1867, %v1853
        %v1873 = vsel %vm1058, %v1868, %v1855
        %v1874 = vsel %vm1058, %v1869, %v1857
        %v1875 = vsel %vm1058, %v1870, %v1859
        %v1876 = vsel %vm1058, %v1871, %v1861
        %v1877 = vld [vmem:[#allocation11] sm:$0xff]
        %v1878 = vld [vmem:[#allocation11 + $0x8] sm:$0xff]
        %v1879 = vld [vmem:[#allocation11 + $0x10] sm:$0xff]
        %v1880 = vld [vmem:[#allocation11 + $0x18] sm:$0xff]
        %v1881 = vld [vmem:[#allocation11 + $0x20] sm:$0xff]
        %v1882 = vld [vmem:[#allocation11 + $0x28] sm:$0xff]
        %v1883 = vld [vmem:[%s15] sm:$0x1]
        %v1885 = vlaneseq
        %v1886 = vshrl.u32 %v1885, 7
        %v1887 = vsub.s32 0, %v1886
        %v1888 = vrot.slane %v1883, %v1887
        %v1891 = vsel %vm1060, %v1872, 0
        %v1894 = vsel %vm1060, %v1873, 0
        %v1897 = vsel %vm1060, %v1874, 0
        %v1900 = vsel %vm1060, %v1875, 0
        %v1903 = vsel %vm1060, %v1876, 0
        %1905 = vmatprep.subr.mxu0 0.0
        %1906 = vmatpush1.msra.mxu0 %v1877
        %1907 = vmatprep.subr.mxu0 0.0
        %1908 = vmatpush1.msra.mxu0 %v1878
        %1909 = vmatprep.subr.mxu0 0.0
        %1910 = vmatpush1.msra.mxu0 %v1879
        %1911 = vmatprep.subr.mxu0 0.0
        %1912 = vmatpush1.msra.mxu0 %v1880
        %1913 = vmatprep.subr.mxu0 0.0
        %1914 = vmatpush1.msra.mxu0 %v1881
        %1915 = vmatprep.subr.mxu0 0.0
        %1916 = vmatpush1.msra.mxu0 %v1882
        %1917 = vmatprep.subr.mxu0 0.0
        %1918 = vmatpush1.msra.mxu0 0.0
        %1919 = vmatprep.subr.mxu0 0.0
        %1920 = vmatpush1.msra.mxu0 0.0
        %1921 = vmatprep.subr.mxu0 0.0
        %1922 = vmatpush1.msra.mxu0 0.0
        %1923 = vmatprep.subr.mxu0 0.0
        %1924 = vmatpush1.msra.mxu0 0.0
        %1925 = vmatprep.subr.mxu0 0.0
        %1926 = vmatpush1.msra.mxu0 0.0
        %1927 = vmatprep.subr.mxu0 0.0
        %1928 = vmatpush1.msra.mxu0 0.0
        %1929 = vmatprep.subr.mxu0 0.0
        %1930 = vmatpush1.msra.mxu0 0.0
        %1931 = vmatprep.subr.mxu0 0.0
        %1932 = vmatpush1.msra.mxu0 0.0
        %1933 = vmatprep.subr.mxu0 0.0
        %1934 = vmatpush1.msra.mxu0 0.0
        %1935 = vmatprep.subr.mxu0 0.0
        %1936 = vmatpush1.msra.mxu0 0.0
        %1937 = vmatprep.subr.mxu0 0.0
        %1938 = vmatpush1.msra.mxu0 0.0
        %1939 = vmatprep.subr.mxu0 0.0
        %1940 = vmatpush1.msra.mxu0 0.0
        %1941 = vmatprep.subr.mxu0 0.0
        %1942 = vmatpush1.msra.mxu0 0.0
        %1943 = vmatprep.subr.mxu0 0.0
        %1944 = vmatpush1.msra.mxu0 0.0
        %1945 = vmatprep.subr.mxu0 0.0
        %1946 = vmatpush1.msra.mxu0 0.0
        %1947 = vmatprep.subr.mxu0 0.0
        %1948 = vmatpush1.msra.mxu0 0.0
        %1949 = vmatprep.subr.mxu0 0.0
        %1950 = vmatpush1.msra.mxu0 0.0
        %1951 = vmatprep.subr.mxu0 0.0
        %1952 = vmatpush1.msra.mxu0 0.0
        %1953 = vmatprep.subr.mxu0 0.0
        %1954 = vmatpush1.msra.mxu0 0.0
        %1955 = vmatprep.subr.mxu0 0.0
        %1956 = vmatpush1.msra.mxu0 0.0
        %1957 = vmatprep.subr.mxu0 0.0
        %1958 = vmatpush1.msra.mxu0 0.0
        %1959 = vmatprep.subr.mxu0 0.0
        %1960 = vmatpush1.msra.mxu0 0.0
        %1961 = vmatprep.subr.mxu0 0.0
        %1962 = vmatpush1.msra.mxu0 0.0
        %1963 = vmatprep.subr.mxu0 0.0
        %1964 = vmatpush1.msra.mxu0 0.0
        %1965 = vmatprep.subr.mxu0 0.0
        %1966 = vmatpush1.msra.mxu0 0.0
        %1967 = vmatprep.subr.mxu0 0.0
        %1968 = vmatpush1.msra.mxu0 0.0
        %1969 = vmatprep.mubr.f32.mxu0 0.0
        %1970 = vmatmul.mubr.f32.gmra.mrb[0].mxu0 %v1891
        %v1971 = vpop.f32.mrb[0].mxu0
        %v1972 = vadd.f32 %v1888, %v1971
        %v1973 = vpop.f32.mrb[0].mxu0
        %1974 = vmatprep.mubr.f32.mxu0 0.0
        %1975 = vmatmul.mubr.f32.gmra.mrb[0].mxu0 %v1894
        %v1976 = vpop.f32.mrb[0].mxu0
        %v1977 = vadd.f32 %v1888, %v1976
        %v1978 = vpop.f32.mrb[0].mxu0
        %1979 = vmatprep.mubr.f32.mxu0 0.0
        %1980 = vmatmul.mubr.f32.gmra.mrb[0].mxu0 %v1897
        %v1981 = vpop.f32.mrb[0].mxu0
        %v1982 = vadd.f32 %v1888, %v1981
        %v1983 = vpop.f32.mrb[0].mxu0
        %1984 = vmatprep.mubr.f32.mxu0 0.0
        %1985 = vmatmul.mubr.f32.gmra.mrb[0].mxu0 %v1900
        %v1986 = vpop.f32.mrb[0].mxu0
        %v1987 = vadd.f32 %v1888, %v1986
        %v1988 = vpop.f32.mrb[0].mxu0
        %1989 = vmatprep.mubr.f32.mxu0 0.0
        %1990 = vmatmul.mubr.f32.gmra.mrb[0].mxu0 %v1903
        %v1991 = vpop.f32.mrb[0].mxu0
        %v1992 = vadd.f32 %v1888, %v1991
        %v1993 = vpop.f32.mrb[0].mxu0
        %1994 = vdwg.mxu0
        %vm1995 = vcmp.gt.f32.partialorder %v1972, 0.0
        %vm1996 = vcmp.gt.f32.partialorder %v1977, 0.0
        %vm1997 = vcmp.gt.f32.partialorder %v1982, 0.0
        %vm1998 = vcmp.gt.f32.partialorder %v1987, 0.0
        %vm1999 = vcmp.gt.f32.partialorder %v1992, 0.0
        %v2000 = vmin.f32 %v1972, 0.0
        %v2001 = vmin.f32 %v1977, 0.0
        %v2002 = vmin.f32 %v1982, 0.0
        %v2003 = vmin.f32 %v1987, 0.0
        %v2004 = vmin.f32 %v1992, 0.0
        %v2005 = vmul.f32 %v2000, 1.442695
        %v2006 = vpow.pop %v2005
        %v2007 = vmul.f32 %v2001, 1.442695
        %v2008 = vpow.pop %v2007
        %v2009 = vmul.f32 %v2002, 1.442695
        %v2010 = vpow.pop %v2009
        %v2011 = vmul.f32 %v2003, 1.442695
        %v2012 = vpow.pop %v2011
        %v2013 = vmul.f32 %v2004, 1.442695
        %v2014 = vpow.pop %v2013
        %v2015 = vsub.f32 %v2006, 1.0
        %v2016 = vsub.f32 %v2008, 1.0
        %v2017 = vsub.f32 %v2010, 1.0
        %v2018 = vsub.f32 %v2012, 1.0
        %v2019 = vsub.f32 %v2014, 1.0
        %v2020 = vsel %vm1995, %v1972, %v2015
        %v2021 = vsel %vm1996, %v1977, %v2016
        %v2022 = vsel %vm1997, %v1982, %v2017
        %v2023 = vsel %vm1998, %v1987, %v2018
        %v2024 = vsel %vm1999, %v1992, %v2019
        %v2025 = vld [vmem:[%s16] sm:$0xff]
        %v2026 = vld [vmem:[%s17] sm:$0x1]
        %v2028 = vlaneseq
        %v2029 = vshrl.u32 %v2028, 7
        %v2030 = vsub.s32 0, %v2029
        %v2031 = vrot.slane %v2026, %v2030
        %v2038 = vrot.slane %v2020, 1
        %v2039 = vrot.slane %v2021, 1
        %v2040 = vsel %vm1369, %v2038, %v2039
        %v2041 = vrot.slane %v2022, 1
        %v2042 = vsel %vm1369, %v2039, %v2041
        %v2043 = vrot.slane %v2023, 1
        %v2044 = vsel %vm1369, %v2041, %v2043
        %v2045 = vrot.slane %v2024, 1
        %v2046 = vsel %vm1369, %v2043, %v2045
        %v2047 = vsel %vm823, %v2040, 0
        %v2049 = vsel %vm823, %v2042, 0
        %v2051 = vsel %vm823, %v2044, 0
        %v2053 = vsel %vm823, %v2046, 0
        %2055 = vmatprep.subr.mxu0 0.0
        %2056 = vmatpush1.msra.mxu0 %v2025
        %2057 = vmatprep.subr.mxu0 0.0
        %2058 = vmatpush1.msra.mxu0 0.0
        %2059 = vmatprep.subr.mxu0 0.0
        %2060 = vmatpush1.msra.mxu0 0.0
        %2061 = vmatprep.subr.mxu0 0.0
        %2062 = vmatpush1.msra.mxu0 0.0
        %2063 = vmatprep.subr.mxu0 0.0
        %2064 = vmatpush1.msra.mxu0 0.0
        %2065 = vmatprep.subr.mxu0 0.0
        %2066 = vmatpush1.msra.mxu0 0.0
        %2067 = vmatprep.subr.mxu0 0.0
        %2068 = vmatpush1.msra.mxu0 0.0
        %2069 = vmatprep.subr.mxu0 0.0
        %2070 = vmatpush1.msra.mxu0 0.0
        %2071 = vmatprep.subr.mxu0 0.0
        %2072 = vmatpush1.msra.mxu0 0.0
        %2073 = vmatprep.subr.mxu0 0.0
        %2074 = vmatpush1.msra.mxu0 0.0
        %2075 = vmatprep.subr.mxu0 0.0
        %2076 = vmatpush1.msra.mxu0 0.0
        %2077 = vmatprep.subr.mxu0 0.0
        %2078 = vmatpush1.msra.mxu0 0.0
        %2079 = vmatprep.subr.mxu0 0.0
        %2080 = vmatpush1.msra.mxu0 0.0
        %2081 = vmatprep.subr.mxu0 0.0
        %2082 = vmatpush1.msra.mxu0 0.0
        %2083 = vmatprep.subr.mxu0 0.0
        %2084 = vmatpush1.msra.mxu0 0.0
        %2085 = vmatprep.subr.mxu0 0.0
        %2086 = vmatpush1.msra.mxu0 0.0
        %2087 = vmatprep.subr.mxu0 0.0
        %2088 = vmatpush1.msra.mxu0 0.0
        %2089 = vmatprep.subr.mxu0 0.0
        %2090 = vmatpush1.msra.mxu0 0.0
        %2091 = vmatprep.subr.mxu0 0.0
        %2092 = vmatpush1.msra.mxu0 0.0
        %2093 = vmatprep.subr.mxu0 0.0
        %2094 = vmatpush1.msra.mxu0 0.0
        %2095 = vmatprep.subr.mxu0 0.0
        %2096 = vmatpush1.msra.mxu0 0.0
        %2097 = vmatprep.subr.mxu0 0.0
        %2098 = vmatpush1.msra.mxu0 0.0
        %2099 = vmatprep.subr.mxu0 0.0
        %2100 = vmatpush1.msra.mxu0 0.0
        %2101 = vmatprep.subr.mxu0 0.0
        %2102 = vmatpush1.msra.mxu0 0.0
        %2103 = vmatprep.subr.mxu0 0.0
        %2104 = vmatpush1.msra.mxu0 0.0
        %2105 = vmatprep.subr.mxu0 0.0
        %2106 = vmatpush1.msra.mxu0 0.0
        %2107 = vmatprep.subr.mxu0 0.0
        %2108 = vmatpush1.msra.mxu0 0.0
        %2109 = vmatprep.subr.mxu0 0.0
        %2110 = vmatpush1.msra.mxu0 0.0
        %2111 = vmatprep.subr.mxu0 0.0
        %2112 = vmatpush1.msra.mxu0 0.0
        %2113 = vmatprep.subr.mxu0 0.0
        %2114 = vmatpush1.msra.mxu0 0.0
        %2115 = vmatprep.subr.mxu0 0.0
        %2116 = vmatpush1.msra.mxu0 0.0
        %2117 = vmatprep.subr.mxu0 0.0
        %2118 = vmatpush1.msra.mxu0 0.0
        %2119 = vmatprep.mubr.f32.mxu0 0.0
        %2120 = vmatmul.mubr.f32.gmra.mrb[0].mxu0 %v2047
        %v2121 = vpop.f32.mrb[0].mxu0
        %v2122 = vadd.f32 %v2031, %v2121
        %v2123 = vpop.f32.mrb[0].mxu0
        %2124 = vmatprep.mubr.f32.mxu0 0.0
        %2125 = vmatmul.mubr.f32.gmra.mrb[0].mxu0 %v2049
        %v2126 = vpop.f32.mrb[0].mxu0
        %v2127 = vadd.f32 %v2031, %v2126
        %v2128 = vpop.f32.mrb[0].mxu0
        %2129 = vmatprep.mubr.f32.mxu0 0.0
        %2130 = vmatmul.mubr.f32.gmra.mrb[0].mxu0 %v2051
        %v2131 = vpop.f32.mrb[0].mxu0
        %v2132 = vadd.f32 %v2031, %v2131
        %v2133 = vpop.f32.mrb[0].mxu0
        %2134 = vmatprep.mubr.f32.mxu0 0.0
        %2135 = vmatmul.mubr.f32.gmra.mrb[0].mxu0 %v2053
        %v2136 = vpop.f32.mrb[0].mxu0
        %v2137 = vadd.f32 %v2031, %v2136
        %v2138 = vpop.f32.mrb[0].mxu0
        %2139 = vdwg.mxu0
        %2140 = vst.msk [vmem:[%s655] sm:$0xff] %vm684, %v2122
        %2141 = vst.msk [vmem:[%s655 + $0x8] sm:$0xff] %vm684, %v2127
        %2142 = vst.msk [vmem:[%s655 + $0x10] sm:$0xff] %vm684, %v2132
        %2143 = vst.msk [vmem:[%s655 + $0x18] sm:$0xff] %vm684, %v2137
        %p2144 = scmp.lt.s32.totalorder %s33, 7
        %s2145 = scalar_select %p2144, %s33, 7
        %s2146 = smul.addr %s2145, 4
        %s2147 = smul.addr %s2146, 8
        %s2148 = scalar_lea.vmem %s18, %s2147
        // Predicated region
        $region117: #{a_call__.1} parent=91 // pred_check
          %p2149 = pneg %p434
        $region118: #{a_call__.1} parent=91 // pred_check_branch
          %2151 = sbr.rel (%p2149) target = $region120
        $region119: #{a_call__.1} parent=91 // pred_region
          _
        $region120: #{a_call__.1} parent=91 // pred_fallthru
          _
      $region92: #{a_call__.1} parent=5 // pred_fallthru
        _
      %p2152 = scmp.le.s32.totalorder 2, %s28
      // Predicated region
      $region121: #{a_call__.1} parent=5 // pred_check
        %p2153 = pneg %p2152
      $region122: #{a_call__.1} parent=5 // pred_check_branch
        %2155 = sbr.rel (%p2153) target = $region124
      $region123: #{a_call__.1} parent=5 // pred_region
        %s2156 = ssub.s32 %s28, 2
        // Predicated region
        $region125: #{a_call__.1} parent=123 // pred_check
          %p2157 = pneg %p440
        $region126: #{a_call__.1} parent=123 // pred_check_branch
          %2159 = sbr.rel (%p2157) target = $region128
        $region127: #{a_call__.1} parent=123 // pred_region
          %p2160 = scmp.lt.s32.totalorder %s34, 7
          %s2161 = scalar_select %p2160, %s34, 7
          %s2162 = smul.addr %s2161, 4
          %s2163 = smul.addr %s2162, 8
          %s2164 = scalar_lea.vmem %s18, %s2163
        $region128: #{a_call__.1} parent=123 // pred_fallthru
          _
      $region124: #{a_call__.1} parent=5 // pred_fallthru
        _
    $region6: #{a_call__.1} parent=1 // loop_footer
      %s32 = sadd.s32 1, %s28
    $region7: #{a_call__.1} parent=1 // loop_footer_branch
      %27 = sbr.rel target = $region3
    $region8: #{a_call__.1} parent=1 // loop_exit
      _
    %2165 = vsyncpa [#allocation4], 1
    %s2166 = scalar_lea.sflag [#allocation4], 1
    %2167 = vsyncpa %s2166, 1
    %2168 = vsyncpa [#allocation6], 1
    %2169 = vsyncpa [#allocation9], 1
    %2170 = vsyncpa [#allocation12], 1

</llo_original>
